<compile_context>
chip_gen: v6e
topology: v6e:2x2x1
jax: 0.10.0
libtpu: 0.0.40
codegen_flags: <defaults>
</compile_context>

<pallas_src>
import re
from functools import partial

import numpy as np
import jax
import jax.numpy as jnp
from jax.experimental import pallas as pl
from jax.experimental.pallas import tpu as pltpu


def _round_up(x, m):
    return (x + m - 1) // m * m


def _default_bf16_epilogue():
    # bf16 VALU exists on v6e / v7x; v5e and older have none -> keep f32 epilogues there.
    try:
        kind = jax.devices()[0].device_kind
        m = re.search(r"(\d+)", kind)
        return bool(m) and int(m.group(1)) >= 6
    except Exception:
        return False


def _message_kernel(e_ref, scale_ref,
                    w1_ref, b1_ref, w2_ref, b2_ref, w3_ref, b3_ref,
                    w4_ref, b4_ref, out_ref, *, bf16_epilogue):
    """Fused NNet MLP + per-edge contraction on one (TE, .) edge tile."""

    def layer(x_bf16, w_ref, b_ref):
        y = jnp.dot(x_bf16, w_ref[...], preferred_element_type=jnp.float32)
        if bf16_epilogue:
            # v6e/v7x: bias-add + ReLU in packed bf16 (the next matmul wants bf16 anyway).
            return jnp.maximum(y.astype(jnp.bfloat16) + b_ref[...], 0.0)
        # v5e: no bf16 VALU -> keep the epilogue in f32, cast only for the next MXU op.
        return jnp.maximum(y + b_ref[...], 0.0).astype(jnp.bfloat16)

    x = layer(e_ref[...].astype(jnp.bfloat16), w1_ref, b1_ref)
    x = layer(x, w2_ref, b2_ref)
    x = layer(x, w3_ref, b3_ref)

    # Layer 4 with the 0/1 selector already folded into W4'/b4' (exact fold), so this
    # matmul directly yields  sum_i eo[e, o*in + i]  without materializing (TE, out*in).
    m = jnp.dot(x, w4_ref[...], preferred_element_type=jnp.float32) + b4_ref[...]   # (TE, out) f32

    # torch expand => every h_w_rows row is one scalar broadcast across the `in` columns:
    #   m_new[e, o] = scale[e] * sum_i eo[e, o*in + i]
    # Scale is applied last, so zero-padded edge rows stay exactly zero before slicing.
    out_ref[...] = m * scale_ref[...]
    # TODO(synk): out width (= params['out'] = 16 here) keeps stores masked at 16/128 lanes;
    # a (TE,out)->(TE/8,8*out) lane-packing relayout would make them dense, but it burns
    # XLU / vector-extended slots shared with the MXU push in this MXU-bound kernel —
    # enable only after a bundle-dump measurement shows the vst slot actually binds.


def message_function_mpnn(h_v, h_w, e_vw, params, weights, *, te=512, bf16_epilogue=None):
    """Pallas TPU forward of MessageFunction('mpnn').

    h_v : (B, n, in)   node states (only n = h_v.shape[1] enters the torch expand)
    h_w : (B*n, in)    sender node states
    e_vw: (E, ef)      edge features, E = B*n*n
    params : {'in', 'out', 'edge_feat'}
    weights: 4 x (W (d_in, d_out) f32, b (1, d_out) f32)  -- NNet parameters
    """
    in_dim, out_dim = int(params['in']), int(params['out'])
    E, ef = e_vw.shape
    n = h_v.shape[1]
    assert h_w.shape[1] == in_dim and h_w.shape[0] * n == E, \
        "edge / node-replication row counts must match (as in torch.bmm)"
    # The scale-after-sum rewrite is exact whenever the torch expand yields constant
    # rows, i.e. n % in == 0 (covers the repo's n == in usage).
    # TODO(synk): for n % in != 0 the general (E, in) h_w_rows operand would be needed.
    assert n % in_dim == 0, "fast path requires h_v.shape[1] % params['in'] == 0"

    if bf16_epilogue is None:
        bf16_epilogue = _default_bf16_epilogue()
    ep_dtype = jnp.bfloat16 if bf16_epilogue else jnp.float32

    # (E, 1) per-edge scalar: the constant value of each torch-expanded h_w_rows row.
    scale = jnp.repeat(h_w.reshape(-1).astype(jnp.float32), n // in_dim).reshape(E, 1)

    (w1, b1), (w2, b2), (w3, b3), (w4, b4) = weights
    d3 = w4.shape[0]
    # Exact fold of the 0/1 selector (sum over the `in` sub-columns) into layer 4.
    w4p = w4.astype(jnp.float32).reshape(d3, out_dim, in_dim).sum(axis=-1)          # (d3, out)
    b4p = b4.astype(jnp.float32).reshape(out_dim, in_dim).sum(axis=-1).reshape(1, out_dim)

    ws = [w1.astype(jnp.bfloat16), w2.astype(jnp.bfloat16),
          w3.astype(jnp.bfloat16), w4p.astype(jnp.bfloat16)]                        # MXU inputs
    bs = [b1.reshape(1, -1).astype(ep_dtype), b2.reshape(1, -1).astype(ep_dtype),
          b3.reshape(1, -1).astype(ep_dtype), b4p]                                  # last bias f32

    # Edge tiling: cap the tile so the grid has >= 8 steps when E allows it (>= 4 steps
    # per core on v7x megacore); remainder rows are zero-padded (zero scale -> zero rows).
    te_cap = _round_up(max(128, -(-E // 8)), 8)
    te = max(8, min(_round_up(int(te), 8), te_cap, _round_up(E, 8)))
    E_pad = _round_up(E, te)
    e_p, scale_p = e_vw, scale
    if E_pad != E:
        e_p = jnp.pad(e_vw, ((0, E_pad - E), (0, 0)))
        scale_p = jnp.pad(scale, ((0, E_pad - E), (0, 0)))
    grid = (E_pad // te,)

    def const_spec(a):   # weights / biases: constant block index -> DMA'd only once.
        return pl.BlockSpec(tuple(a.shape), lambda i: (0,) * a.ndim)

    # Advisory cost so XLA schedules neighbours around the custom call.
    dims = (ef, w1.shape[1], w2.shape[1], w3.shape[1], out_dim)
    flops = 2 * E_pad * sum(a * b for a, b in zip(dims[:-1], dims[1:]))
    bytes_accessed = int(e_p.size * e_p.dtype.itemsize + scale_p.size * 4
                         + E_pad * out_dim * 4
                         + sum(int(w.size) * 2 for w in ws)
                         + sum(int(b.size) * b.dtype.itemsize for b in bs))

    kernel = partial(_message_kernel, bf16_epilogue=bf16_epilogue)
    out = pl.pallas_call(
        kernel,
        out_shape=jax.ShapeDtypeStruct((E_pad, out_dim), jnp.float32),
        grid=grid,
        in_specs=[
            pl.BlockSpec((te, ef), lambda i: (i, 0)),      # e_vw tile
            pl.BlockSpec((te, 1), lambda i: (i, 0)),       # per-edge scale
            const_spec(ws[0]), const_spec(bs[0]),
            const_spec(ws[1]), const_spec(bs[1]),
            const_spec(ws[2]), const_spec(bs[2]),
            const_spec(ws[3]), const_spec(bs[3]),
        ],
        out_specs=pl.BlockSpec((te, out_dim), lambda i: (i, 0)),
        compiler_params=pltpu.CompilerParams(
            dimension_semantics=("parallel",),             # megacore sharding on v7x
        ),
        cost_estimate=pl.CostEstimate(flops=int(flops), transcendentals=0,
                                      bytes_accessed=bytes_accessed),
    )(e_p, scale_p, ws[0], bs[0], ws[1], bs[1], ws[2], bs[2], ws[3], bs[3])
    return out[:E]


def reference(h_v, h_w, e_vw, params, weights, *, bf16_epilogue=False):
    # Pure-JAX mirror of the PyTorch forward (general expand semantics, no fold / scale
    # tricks), with the kernel's matmul precision (bf16 inputs, f32 accumulation) and the
    # same epilogue precision so comparisons isolate the algebraic rewrites.
    (w1, b1), (w2, b2), (w3, b3), (w4, b4) = weights

    def mm(a, w):
        return jnp.dot(a.astype(jnp.bfloat16), w.astype(jnp.bfloat16),
                       preferred_element_type=jnp.float32)

    def act(y, b):
        if bf16_epilogue:
            z = y.astype(jnp.bfloat16) + b.reshape(1, -1).astype(jnp.bfloat16)
            return jnp.maximum(z, 0.0).astype(jnp.float32)
        return jnp.maximum(y + b.reshape(1, -1), 0.0)

    x = act(mm(e_vw, w1), b1)
    x = act(mm(x, w2), b2)
    x = act(mm(x, w3), b3)
    eo = mm(x, w4) + b4.reshape(1, -1)
    eo = eo.reshape(-1, params['out'], params['in'])
    hwr = jnp.broadcast_to(
        h_w[..., None], (h_w.shape[0], h_w.shape[1], h_v.shape[1])
    ).reshape(-1, params['in'])
    return jnp.einsum('eoi,ei->eo', eo, hwr, preferred_element_type=jnp.float32)


if __name__ == "__main__":
    # Shapes consistent with the module's repo usage:
    #   h_v: (batch, n_nodes, in), h_w: (batch*n_nodes, in), e_vw: (batch*n_nodes^2, edge_feat)
    # n_nodes=32, in=16 (n % in == 0) exercises the rep>1 broadcast case; E=2048 edges
    # gives an 8-step grid (auto-capped te=256) so the pipeline / megacore path is used.
    B, N_NODES, IN, OUT, EDGE_FEAT = 2, 32, 16, 16, 4
    params = {'in': IN, 'out': OUT, 'edge_feat': EDGE_FEAT}

    key = jax.random.PRNGKey(0)
    keys = jax.random.split(key, 8)
    h_v = jax.random.normal(keys[0], (B, N_NODES, IN), jnp.float32)
    h_w = h_v.reshape(-1, IN)
    e_vw = jax.random.normal(keys[1], (B * N_NODES * N_NODES, EDGE_FEAT), jnp.float32)

    # Deterministic NNet parameter init (PyTorch nn.Linear default: U(-1/sqrt(fan_in), ...)).
    hidden_layers = (128, 256, 128)
    dims = (EDGE_FEAT,) + hidden_layers + (IN * OUT,)
    weights = []
    for li in range(len(dims) - 1):
        kw, kb = jax.random.split(keys[2 + li])
        bound = 1.0 / np.sqrt(dims[li])
        W = jax.random.uniform(kw, (dims[li], dims[li + 1]), jnp.float32, -bound, bound)
        b = jax.random.uniform(kb, (1, dims[li + 1]), jnp.float32, -bound, bound)
        weights.append((W, b))

    bf16_ep = _default_bf16_epilogue()

    # One jit around wrapper + pallas_call so the scale-repeat / pad / weight-fold passes
    # fuse into the same XLA computation as the kernel launch.
    fwd = jax.jit(lambda hv, hw, e, w: message_function_mpnn(
        hv, hw, e, params, w, te=512, bf16_epilogue=bf16_ep))
    m_new = jax.block_until_ready(fwd(h_v, h_w, e_vw, weights))

    ref = reference(h_v, h_w, e_vw, params, weights, bf16_epilogue=bf16_ep)
    assert m_new.shape == (B * N_NODES * N_NODES, OUT)
    # bf16 MXU inputs + folded-W4 rounding => compare against a precision-matched reference.
    np.testing.assert_allclose(np.asarray(m_new), np.asarray(ref), rtol=2e-2, atol=2e-2)
    print("KERNEL_OK")
</pallas_src>

<mosaic_0001>
module attributes {stable_mosaic.version = 11 : i64} {
  func.func @_message_kernel(%arg0: i32, %arg1: memref<256x4xf32, #tpu.memory_space<vmem>>, %arg2: memref<256x1xf32, #tpu.memory_space<vmem>>, %arg3: memref<4x128xbf16, #tpu.memory_space<vmem>>, %arg4: memref<1x128xf32, #tpu.memory_space<vmem>>, %arg5: memref<128x256xbf16, #tpu.memory_space<vmem>>, %arg6: memref<1x256xf32, #tpu.memory_space<vmem>>, %arg7: memref<256x128xbf16, #tpu.memory_space<vmem>>, %arg8: memref<1x128xf32, #tpu.memory_space<vmem>>, %arg9: memref<128x16xbf16, #tpu.memory_space<vmem>>, %arg10: memref<1x16xf32, #tpu.memory_space<vmem>>, %arg11: memref<256x16xf32, #tpu.memory_space<vmem>>) attributes {dimension_semantics = [#tpu.dimension_semantics<parallel>], iteration_bounds = array<i64: 8>, scalar_prefetch = 0 : i64, scratch_operands = 0 : i64, tpu.core_type = #tpu.core_type<tc>, window_params = [{transform_indices = @transform_0, window_bounds = array<i64: 256, 4>}, {transform_indices = @transform_1, window_bounds = array<i64: 256, 1>}, {pipeline_mode = #tpu.pipeline_mode<synchronous>, transform_indices = @transform_2, window_bounds = array<i64: 4, 128>}, {pipeline_mode = #tpu.pipeline_mode<synchronous>, transform_indices = @transform_3, window_bounds = array<i64: 1, 128>}, {pipeline_mode = #tpu.pipeline_mode<synchronous>, transform_indices = @transform_4, window_bounds = array<i64: 128, 256>}, {pipeline_mode = #tpu.pipeline_mode<synchronous>, transform_indices = @transform_5, window_bounds = array<i64: 1, 256>}, {pipeline_mode = #tpu.pipeline_mode<synchronous>, transform_indices = @transform_6, window_bounds = array<i64: 256, 128>}, {pipeline_mode = #tpu.pipeline_mode<synchronous>, transform_indices = @transform_7, window_bounds = array<i64: 1, 128>}, {pipeline_mode = #tpu.pipeline_mode<synchronous>, transform_indices = @transform_8, window_bounds = array<i64: 128, 16>}, {pipeline_mode = #tpu.pipeline_mode<synchronous>, transform_indices = @transform_9, window_bounds = array<i64: 1, 16>}, {transform_indices = @transform_10, window_bounds = array<i64: 256, 16>}]} {
    %c0 = arith.constant 0 : index
    %c0_0 = arith.constant 0 : index
    %0 = vector.load %arg1[%c0, %c0_0] : memref<256x4xf32, #tpu.memory_space<vmem>>, vector<256x4xf32>
    %1 = arith.truncf %0 : vector<256x4xf32> to vector<256x4xbf16>
    %c0_1 = arith.constant 0 : index
    %c0_2 = arith.constant 0 : index
    %2 = vector.load %arg3[%c0_1, %c0_2] : memref<4x128xbf16, #tpu.memory_space<vmem>>, vector<4x128xbf16>
    %cst = arith.constant dense<0.000000e+00> : vector<256x128xf32>
    %3 = tpu.matmul %1, %2, %cst {dimension_numbers = #tpu.dot_dimension_numbers<[1], [0], [0], [1], [0, 0, 1, 1], [], []>} : vector<256x4xbf16>, vector<4x128xbf16>, vector<256x128xf32> -> vector<256x128xf32>
    %c0_3 = arith.constant 0 : index
    %c0_4 = arith.constant 0 : index
    %4 = vector.load %arg4[%c0_3, %c0_4] : memref<1x128xf32, #tpu.memory_space<vmem>>, vector<1x128xf32>
    %5 = vector.broadcast %4 : vector<1x128xf32> to vector<256x128xf32>
    %6 = arith.addf %3, %5 : vector<256x128xf32>
    %cst_5 = arith.constant 0.000000e+00 : f32
    %7 = vector.broadcast %cst_5 : f32 to vector<256x128xf32>
    %8 = arith.maximumf %6, %7 : vector<256x128xf32>
    %9 = arith.truncf %8 : vector<256x128xf32> to vector<256x128xbf16>
    %c0_6 = arith.constant 0 : index
    %c0_7 = arith.constant 0 : index
    %10 = vector.load %arg5[%c0_6, %c0_7] : memref<128x256xbf16, #tpu.memory_space<vmem>>, vector<128x256xbf16>
    %cst_8 = arith.constant dense<0.000000e+00> : vector<256x256xf32>
    %11 = tpu.matmul %9, %10, %cst_8 {dimension_numbers = #tpu.dot_dimension_numbers<[1], [0], [0], [1], [0, 0, 1, 1], [], []>} : vector<256x128xbf16>, vector<128x256xbf16>, vector<256x256xf32> -> vector<256x256xf32>
    %c0_9 = arith.constant 0 : index
    %c0_10 = arith.constant 0 : index
    %12 = vector.load %arg6[%c0_9, %c0_10] : memref<1x256xf32, #tpu.memory_space<vmem>>, vector<1x256xf32>
    %13 = vector.broadcast %12 : vector<1x256xf32> to vector<256x256xf32>
    %14 = arith.addf %11, %13 : vector<256x256xf32>
    %cst_11 = arith.constant 0.000000e+00 : f32
    %15 = vector.broadcast %cst_11 : f32 to vector<256x256xf32>
    %16 = arith.maximumf %14, %15 : vector<256x256xf32>
    %17 = arith.truncf %16 : vector<256x256xf32> to vector<256x256xbf16>
    %c0_12 = arith.constant 0 : index
    %c0_13 = arith.constant 0 : index
    %18 = vector.load %arg7[%c0_12, %c0_13] : memref<256x128xbf16, #tpu.memory_space<vmem>>, vector<256x128xbf16>
    %cst_14 = arith.constant dense<0.000000e+00> : vector<256x128xf32>
    %19 = tpu.matmul %17, %18, %cst_14 {dimension_numbers = #tpu.dot_dimension_numbers<[1], [0], [0], [1], [0, 0, 1, 1], [], []>} : vector<256x256xbf16>, vector<256x128xbf16>, vector<256x128xf32> -> vector<256x128xf32>
    %c0_15 = arith.constant 0 : index
    %c0_16 = arith.constant 0 : index
    %20 = vector.load %arg8[%c0_15, %c0_16] : memref<1x128xf32, #tpu.memory_space<vmem>>, vector<1x128xf32>
    %21 = vector.broadcast %20 : vector<1x128xf32> to vector<256x128xf32>
    %22 = arith.addf %19, %21 : vector<256x128xf32>
    %cst_17 = arith.constant 0.000000e+00 : f32
    %23 = vector.broadcast %cst_17 : f32 to vector<256x128xf32>
    %24 = arith.maximumf %22, %23 : vector<256x128xf32>
    %25 = arith.truncf %24 : vector<256x128xf32> to vector<256x128xbf16>
    %c0_18 = arith.constant 0 : index
    %c0_19 = arith.constant 0 : index
    %26 = vector.load %arg9[%c0_18, %c0_19] : memref<128x16xbf16, #tpu.memory_space<vmem>>, vector<128x16xbf16>
    %cst_20 = arith.constant dense<0.000000e+00> : vector<256x16xf32>
    %27 = tpu.matmul %25, %26, %cst_20 {dimension_numbers = #tpu.dot_dimension_numbers<[1], [0], [0], [1], [0, 0, 1, 1], [], []>} : vector<256x128xbf16>, vector<128x16xbf16>, vector<256x16xf32> -> vector<256x16xf32>
    %c0_21 = arith.constant 0 : index
    %c0_22 = arith.constant 0 : index
    %28 = vector.load %arg10[%c0_21, %c0_22] : memref<1x16xf32, #tpu.memory_space<vmem>>, vector<1x16xf32>
    %29 = vector.broadcast %28 : vector<1x16xf32> to vector<256x16xf32>
    %30 = arith.addf %27, %29 : vector<256x16xf32>
    %c0_23 = arith.constant 0 : index
    %c0_24 = arith.constant 0 : index
    %31 = vector.load %arg2[%c0_23, %c0_24] : memref<256x1xf32, #tpu.memory_space<vmem>>, vector<256x1xf32>
    %32 = vector.broadcast %31 : vector<256x1xf32> to vector<256x16xf32>
    %33 = arith.mulf %30, %32 : vector<256x16xf32>
    %c0_25 = arith.constant 0 : index
    %c0_26 = arith.constant 0 : index
    %34 = vector.load %arg11[%c0_25, %c0_26] : memref<256x16xf32, #tpu.memory_space<vmem>>, vector<256x16xf32>
    tpu.vector_store %arg11[%c0_25, %c0_26], %33 {strides = array<i32>} : memref<256x16xf32, #tpu.memory_space<vmem>>, vector<256x16xf32>,
    return
  }
  func.func @transform_0(%arg0: i32) -> (i32, i32) {
    %c0_i32 = arith.constant 0 : i32
    %c0_i32_0 = arith.constant 0 : i32
    return %arg0, %c0_i32 : i32, i32
  }
  func.func @transform_1(%arg0: i32) -> (i32, i32) {
    %c0_i32 = arith.constant 0 : i32
    %c0_i32_0 = arith.constant 0 : i32
    return %arg0, %c0_i32 : i32, i32
  }
  func.func @transform_2(%arg0: i32) -> (i32, i32) {
    %c0_i32 = arith.constant 0 : i32
    %c0_i32_0 = arith.constant 0 : i32
    %c0_i32_1 = arith.constant 0 : i32
    return %c0_i32, %c0_i32_0 : i32, i32
  }
  func.func @transform_3(%arg0: i32) -> (i32, i32) {
    %c0_i32 = arith.constant 0 : i32
    %c0_i32_0 = arith.constant 0 : i32
    %c0_i32_1 = arith.constant 0 : i32
    return %c0_i32, %c0_i32_0 : i32, i32
  }
  func.func @transform_4(%arg0: i32) -> (i32, i32) {
    %c0_i32 = arith.constant 0 : i32
    %c0_i32_0 = arith.constant 0 : i32
    %c0_i32_1 = arith.constant 0 : i32
    return %c0_i32, %c0_i32_0 : i32, i32
  }
  func.func @transform_5(%arg0: i32) -> (i32, i32) {
    %c0_i32 = arith.constant 0 : i32
    %c0_i32_0 = arith.constant 0 : i32
    %c0_i32_1 = arith.constant 0 : i32
    return %c0_i32, %c0_i32_0 : i32, i32
  }
  func.func @transform_6(%arg0: i32) -> (i32, i32) {
    %c0_i32 = arith.constant 0 : i32
    %c0_i32_0 = arith.constant 0 : i32
    %c0_i32_1 = arith.constant 0 : i32
    return %c0_i32, %c0_i32_0 : i32, i32
  }
  func.func @transform_7(%arg0: i32) -> (i32, i32) {
    %c0_i32 = arith.constant 0 : i32
    %c0_i32_0 = arith.constant 0 : i32
    %c0_i32_1 = arith.constant 0 : i32
    return %c0_i32, %c0_i32_0 : i32, i32
  }
  func.func @transform_8(%arg0: i32) -> (i32, i32) {
    %c0_i32 = arith.constant 0 : i32
    %c0_i32_0 = arith.constant 0 : i32
    %c0_i32_1 = arith.constant 0 : i32
    return %c0_i32, %c0_i32_0 : i32, i32
  }
  func.func @transform_9(%arg0: i32) -> (i32, i32) {
    %c0_i32 = arith.constant 0 : i32
    %c0_i32_0 = arith.constant 0 : i32
    %c0_i32_1 = arith.constant 0 : i32
    return %c0_i32, %c0_i32_0 : i32, i32
  }
  func.func @transform_10(%arg0: i32) -> (i32, i32) {
    %c0_i32 = arith.constant 0 : i32
    %c0_i32_0 = arith.constant 0 : i32
    return %arg0, %c0_i32 : i32, i32
  }
}

</mosaic_0001>

<llo_original>
// kernel: _lambda_.1
$region0: #{_lambda_.1}
  #allocation0 [shape = 'u32[]', space=smem, size = 0x4, offset = 0x4, fixed_abs, tag = 'smem constant byte address 0x4 - core index']
  #allocation1 [shape = 'u32[144,128]{1,0:T(1,128)}', space=vmem, size = 0x12000, scoped, tag = 'internal scratch']
  %s0 = inlined_call_operand.vmem [shape: f32[2048,4], index: 0, kind: input, shape index: {}]
  %s1 = inlined_call_operand.vmem [shape: f32[2048,1], index: 1, kind: input, shape index: {}]
  %s2 = inlined_call_operand.vmem [shape: bf16[4,128], index: 2, kind: input, shape index: {}]
  %s3 = inlined_call_operand.vmem [shape: f32[1,128], index: 3, kind: input, shape index: {}]
  %s4 = inlined_call_operand.vmem [shape: bf16[128,256], index: 4, kind: input, shape index: {}]
  %s5 = inlined_call_operand.vmem [shape: f32[1,256], index: 5, kind: input, shape index: {}]
  %s6 = inlined_call_operand.vmem [shape: bf16[256,128], index: 6, kind: input, shape index: {}]
  %s7 = inlined_call_operand.vmem [shape: f32[1,128], index: 7, kind: input, shape index: {}]
  %s8 = inlined_call_operand.vmem [shape: bf16[128,16], index: 8, kind: input, shape index: {}]
  %s9 = inlined_call_operand.vmem [shape: f32[1,16], index: 9, kind: input, shape index: {}]
  %s10 = inlined_call_operand.vmem [shape: f32[2048,16], index: 10, kind: output, shape index: {}]
  %s11 = sld [smem:[#allocation0]]
  $region73: #{_lambda_.1} parent=0
    _
  %s13 = ssub.s32 1, %s11
  %s14 = scalar_select 0, %s13, %s11
  loop: start=0, step=1, limit=10
  $region2: #{_lambda_.1} parent=0 // loop_pre_header
    _
  $region3: #{_lambda_.1} parent=0 // loop_header
    %s16 = sphi 0, %s20
    %p17 = scmp.ge.s32.totalorder %s16, 10
    %s26 = sphi 0, %s28
    %s29 = sphi 0, %s26
    %s30 = sphi 0, %s29
    %s46 = sphi 0, %s30
    %s52 = sphi 0, %s54
    %s55 = sphi 0, %s52
    %s56 = sphi 0, %s55
    %s72 = sphi 0, %s56
    %s76 = sphi 0, %s76
    %s78 = sphi 0, %s76
    %s79 = sphi 0, %s78
    %s93 = sphi 0, %s79
    %s97 = sphi 0, %s97
    %s99 = sphi 0, %s97
    %s100 = sphi 0, %s99
    %s114 = sphi 0, %s100
    %s118 = sphi 0, %s118
    %s120 = sphi 0, %s118
    %s121 = sphi 0, %s120
    %s135 = sphi 0, %s121
    %s139 = sphi 0, %s139
    %s141 = sphi 0, %s139
    %s142 = sphi 0, %s141
    %s156 = sphi 0, %s142
    %s160 = sphi 0, %s160
    %s162 = sphi 0, %s160
    %s163 = sphi 0, %s162
    %s177 = sphi 0, %s163
    %s181 = sphi 0, %s181
    %s183 = sphi 0, %s181
    %s184 = sphi 0, %s183
    %s198 = sphi 0, %s184
    %s202 = sphi 0, %s202
    %s204 = sphi 0, %s202
    %s205 = sphi 0, %s204
    %s219 = sphi 0, %s205
    %s223 = sphi 0, %s223
    %s225 = sphi 0, %s223
    %s226 = sphi 0, %s225
    %s240 = sphi 0, %s226
    %s246 = sphi 0, %s248
    %s249 = sphi 0, %s246
    %s250 = sphi 0, %s249
    %s266 = sphi 0, %s250
  $region4: #{_lambda_.1} parent=0 // loop_header_branch
    %19 = sbr.rel (%p17) target = $region8
  $region5: #{_lambda_.1} parent=0 // loop_body
    %s21 = ssub.s32 %s16, 1
    %s22 = ssub.s32 %s16, 2
    %s23 = sadd.s32 %s16, 1
    %s24 = ssub.s32 %s16, %s23
    %p25 = scmp.eq.s32.totalorder %s24, 0
    %s27 = sadd.s32 %s26, 1
    %s28 = scalar_select %p25, %s26, %s27
    %p31 = pneg %p25
    %p32 = scmp.eq.s32.totalorder %s16, 7
    %p33 = por %p31, %p32
    %p34 = scmp.ne.s32.totalorder %s26, %s29
    %p35 = scmp.eq.s32.totalorder %s16, 0
    %p36 = por %p34, %p35
    %p37 = scmp.ne.s32.totalorder %s26, %s29
    %p38 = scmp.eq.s32.totalorder %s21, 7
    %p39 = por %p37, %p38
    %p40 = scmp.ne.s32.totalorder %s29, %s30
    %p41 = scmp.eq.s32.totalorder %s21, 0
    %p42 = por %p40, %p41
    %p43 = scmp.ne.s32.totalorder %s29, %s30
    %p44 = scmp.eq.s32.totalorder %s22, 7
    %p45 = por %p43, %p44
    %p47 = scmp.ne.s32.totalorder %s30, %s46
    %p48 = scmp.eq.s32.totalorder %s22, 0
    %p49 = por %p47, %p48
    %s50 = ssub.s32 %s16, %s23
    %p51 = scmp.eq.s32.totalorder %s50, 0
    %s53 = sadd.s32 %s52, 1
    %s54 = scalar_select %p51, %s52, %s53
    %p57 = pneg %p51
    %p58 = scmp.eq.s32.totalorder %s16, 7
    %p59 = por %p57, %p58
    %p60 = scmp.ne.s32.totalorder %s52, %s55
    %p61 = scmp.eq.s32.totalorder %s16, 0
    %p62 = por %p60, %p61
    %p63 = scmp.ne.s32.totalorder %s52, %s55
    %p64 = scmp.eq.s32.totalorder %s21, 7
    %p65 = por %p63, %p64
    %p66 = scmp.ne.s32.totalorder %s55, %s56
    %p67 = scmp.eq.s32.totalorder %s21, 0
    %p68 = por %p66, %p67
    %p69 = scmp.ne.s32.totalorder %s55, %s56
    %p70 = scmp.eq.s32.totalorder %s22, 7
    %p71 = por %p69, %p70
    %p73 = scmp.ne.s32.totalorder %s56, %s72
    %p74 = scmp.eq.s32.totalorder %s22, 0
    %p75 = por %p73, %p74
    %s77 = sadd.s32 %s76, 1
    %p80 = scmp.eq.s32.totalorder %s16, 7
    %p81 = scmp.ne.s32.totalorder %s76, %s78
    %p82 = scmp.eq.s32.totalorder %s16, 0
    %p83 = por %p81, %p82
    %p84 = scmp.ne.s32.totalorder %s76, %s78
    %p85 = scmp.eq.s32.totalorder %s21, 7
    %p86 = por %p84, %p85
    %p87 = scmp.ne.s32.totalorder %s78, %s79
    %p88 = scmp.eq.s32.totalorder %s21, 0
    %p89 = por %p87, %p88
    %p90 = scmp.ne.s32.totalorder %s78, %s79
    %p91 = scmp.eq.s32.totalorder %s22, 7
    %p92 = por %p90, %p91
    %p94 = scmp.ne.s32.totalorder %s79, %s93
    %p95 = scmp.eq.s32.totalorder %s22, 0
    %p96 = por %p94, %p95
    %s98 = sadd.s32 %s97, 1
    %p101 = scmp.eq.s32.totalorder %s16, 7
    %p102 = scmp.ne.s32.totalorder %s97, %s99
    %p103 = scmp.eq.s32.totalorder %s16, 0
    %p104 = por %p102, %p103
    %p105 = scmp.ne.s32.totalorder %s97, %s99
    %p106 = scmp.eq.s32.totalorder %s21, 7
    %p107 = por %p105, %p106
    %p108 = scmp.ne.s32.totalorder %s99, %s100
    %p109 = scmp.eq.s32.totalorder %s21, 0
    %p110 = por %p108, %p109
    %p111 = scmp.ne.s32.totalorder %s99, %s100
    %p112 = scmp.eq.s32.totalorder %s22, 7
    %p113 = por %p111, %p112
    %p115 = scmp.ne.s32.totalorder %s100, %s114
    %p116 = scmp.eq.s32.totalorder %s22, 0
    %p117 = por %p115, %p116
    %s119 = sadd.s32 %s118, 1
    %p122 = scmp.eq.s32.totalorder %s16, 7
    %p123 = scmp.ne.s32.totalorder %s118, %s120
    %p124 = scmp.eq.s32.totalorder %s16, 0
    %p125 = por %p123, %p124
    %p126 = scmp.ne.s32.totalorder %s118, %s120
    %p127 = scmp.eq.s32.totalorder %s21, 7
    %p128 = por %p126, %p127
    %p129 = scmp.ne.s32.totalorder %s120, %s121
    %p130 = scmp.eq.s32.totalorder %s21, 0
    %p131 = por %p129, %p130
    %p132 = scmp.ne.s32.totalorder %s120, %s121
    %p133 = scmp.eq.s32.totalorder %s22, 7
    %p134 = por %p132, %p133
    %p136 = scmp.ne.s32.totalorder %s121, %s135
    %p137 = scmp.eq.s32.totalorder %s22, 0
    %p138 = por %p136, %p137
    %s140 = sadd.s32 %s139, 1
    %p143 = scmp.eq.s32.totalorder %s16, 7
    %p144 = scmp.ne.s32.totalorder %s139, %s141
    %p145 = scmp.eq.s32.totalorder %s16, 0
    %p146 = por %p144, %p145
    %p147 = scmp.ne.s32.totalorder %s139, %s141
    %p148 = scmp.eq.s32.totalorder %s21, 7
    %p149 = por %p147, %p148
    %p150 = scmp.ne.s32.totalorder %s141, %s142
    %p151 = scmp.eq.s32.totalorder %s21, 0
    %p152 = por %p150, %p151
    %p153 = scmp.ne.s32.totalorder %s141, %s142
    %p154 = scmp.eq.s32.totalorder %s22, 7
    %p155 = por %p153, %p154
    %p157 = scmp.ne.s32.totalorder %s142, %s156
    %p158 = scmp.eq.s32.totalorder %s22, 0
    %p159 = por %p157, %p158
    %s161 = sadd.s32 %s160, 1
    %p164 = scmp.eq.s32.totalorder %s16, 7
    %p165 = scmp.ne.s32.totalorder %s160, %s162
    %p166 = scmp.eq.s32.totalorder %s16, 0
    %p167 = por %p165, %p166
    %p168 = scmp.ne.s32.totalorder %s160, %s162
    %p169 = scmp.eq.s32.totalorder %s21, 7
    %p170 = por %p168, %p169
    %p171 = scmp.ne.s32.totalorder %s162, %s163
    %p172 = scmp.eq.s32.totalorder %s21, 0
    %p173 = por %p171, %p172
    %p174 = scmp.ne.s32.totalorder %s162, %s163
    %p175 = scmp.eq.s32.totalorder %s22, 7
    %p176 = por %p174, %p175
    %p178 = scmp.ne.s32.totalorder %s163, %s177
    %p179 = scmp.eq.s32.totalorder %s22, 0
    %p180 = por %p178, %p179
    %s182 = sadd.s32 %s181, 1
    %p185 = scmp.eq.s32.totalorder %s16, 7
    %p186 = scmp.ne.s32.totalorder %s181, %s183
    %p187 = scmp.eq.s32.totalorder %s16, 0
    %p188 = por %p186, %p187
    %p189 = scmp.ne.s32.totalorder %s181, %s183
    %p190 = scmp.eq.s32.totalorder %s21, 7
    %p191 = por %p189, %p190
    %p192 = scmp.ne.s32.totalorder %s183, %s184
    %p193 = scmp.eq.s32.totalorder %s21, 0
    %p194 = por %p192, %p193
    %p195 = scmp.ne.s32.totalorder %s183, %s184
    %p196 = scmp.eq.s32.totalorder %s22, 7
    %p197 = por %p195, %p196
    %p199 = scmp.ne.s32.totalorder %s184, %s198
    %p200 = scmp.eq.s32.totalorder %s22, 0
    %p201 = por %p199, %p200
    %s203 = sadd.s32 %s202, 1
    %p206 = scmp.eq.s32.totalorder %s16, 7
    %p207 = scmp.ne.s32.totalorder %s202, %s204
    %p208 = scmp.eq.s32.totalorder %s16, 0
    %p209 = por %p207, %p208
    %p210 = scmp.ne.s32.totalorder %s202, %s204
    %p211 = scmp.eq.s32.totalorder %s21, 7
    %p212 = por %p210, %p211
    %p213 = scmp.ne.s32.totalorder %s204, %s205
    %p214 = scmp.eq.s32.totalorder %s21, 0
    %p215 = por %p213, %p214
    %p216 = scmp.ne.s32.totalorder %s204, %s205
    %p217 = scmp.eq.s32.totalorder %s22, 7
    %p218 = por %p216, %p217
    %p220 = scmp.ne.s32.totalorder %s205, %s219
    %p221 = scmp.eq.s32.totalorder %s22, 0
    %p222 = por %p220, %p221
    %s224 = sadd.s32 %s223, 1
    %p227 = scmp.eq.s32.totalorder %s16, 7
    %p228 = scmp.ne.s32.totalorder %s223, %s225
    %p229 = scmp.eq.s32.totalorder %s16, 0
    %p230 = por %p228, %p229
    %p231 = scmp.ne.s32.totalorder %s223, %s225
    %p232 = scmp.eq.s32.totalorder %s21, 7
    %p233 = por %p231, %p232
    %p234 = scmp.ne.s32.totalorder %s225, %s226
    %p235 = scmp.eq.s32.totalorder %s21, 0
    %p236 = por %p234, %p235
    %p237 = scmp.ne.s32.totalorder %s225, %s226
    %p238 = scmp.eq.s32.totalorder %s22, 7
    %p239 = por %p237, %p238
    %p241 = scmp.ne.s32.totalorder %s226, %s240
    %p242 = scmp.eq.s32.totalorder %s22, 0
    %p243 = por %p241, %p242
    %s244 = ssub.s32 %s16, %s23
    %p245 = scmp.eq.s32.totalorder %s244, 0
    %s247 = sadd.s32 %s246, 1
    %s248 = scalar_select %p245, %s246, %s247
    %p251 = pneg %p245
    %p252 = scmp.eq.s32.totalorder %s16, 7
    %p253 = por %p251, %p252
    %p254 = scmp.ne.s32.totalorder %s246, %s249
    %p255 = scmp.eq.s32.totalorder %s16, 0
    %p256 = por %p254, %p255
    %p257 = scmp.ne.s32.totalorder %s246, %s249
    %p258 = scmp.eq.s32.totalorder %s21, 7
    %p259 = por %p257, %p258
    %p260 = scmp.ne.s32.totalorder %s249, %s250
    %p261 = scmp.eq.s32.totalorder %s21, 0
    %p262 = por %p260, %p261
    %p263 = scmp.ne.s32.totalorder %s249, %s250
    %p264 = scmp.eq.s32.totalorder %s22, 7
    %p265 = por %p263, %p264
    %p267 = scmp.ne.s32.totalorder %s250, %s266
    %p268 = scmp.eq.s32.totalorder %s22, 0
    %p269 = por %p267, %p268
    %p270 = scmp.le.s32.totalorder 1, %s16
    %p271 = scmp.lt.s32.totalorder %s16, 9
    %p272 = pnand %p270, %p271
    %p273 = pneg %p272
    // Predicated region
    $region9: #{_lambda_.1} parent=5 // pred_check
      _
    $region10: #{_lambda_.1} parent=5 // pred_check_branch
      %275 = sbr.rel (%p272) target = $region12
    $region11: #{_lambda_.1} parent=5 // pred_region
      %s276 = ssub.s32 %s16, 1
      // Predicated region
      $region13: #{_lambda_.1} parent=11 // pred_check
        %p277 = pneg %p89
      $region14: #{_lambda_.1} parent=11 // pred_check_branch
        %279 = sbr.rel (%p277) target = $region16
      $region15: #{_lambda_.1} parent=11 // pred_region
        _
      $region16: #{_lambda_.1} parent=11 // pred_fallthru
        _
      // Predicated region
      $region17: #{_lambda_.1} parent=11 // pred_check
        %p280 = pneg %p110
      $region18: #{_lambda_.1} parent=11 // pred_check_branch
        %282 = sbr.rel (%p280) target = $region20
      $region19: #{_lambda_.1} parent=11 // pred_region
        _
      $region20: #{_lambda_.1} parent=11 // pred_fallthru
        _
      // Predicated region
      $region21: #{_lambda_.1} parent=11 // pred_check
        %p283 = pneg %p131
      $region22: #{_lambda_.1} parent=11 // pred_check_branch
        %285 = sbr.rel (%p283) target = $region24
      $region23: #{_lambda_.1} parent=11 // pred_region
        _
      $region24: #{_lambda_.1} parent=11 // pred_fallthru
        _
      // Predicated region
      $region25: #{_lambda_.1} parent=11 // pred_check
        %p286 = pneg %p152
      $region26: #{_lambda_.1} parent=11 // pred_check_branch
        %288 = sbr.rel (%p286) target = $region28
      $region27: #{_lambda_.1} parent=11 // pred_region
        _
      $region28: #{_lambda_.1} parent=11 // pred_fallthru
        _
      // Predicated region
      $region29: #{_lambda_.1} parent=11 // pred_check
        %p289 = pneg %p173
      $region30: #{_lambda_.1} parent=11 // pred_check_branch
        %291 = sbr.rel (%p289) target = $region32
      $region31: #{_lambda_.1} parent=11 // pred_region
        _
      $region32: #{_lambda_.1} parent=11 // pred_fallthru
        _
      // Predicated region
      $region33: #{_lambda_.1} parent=11 // pred_check
        %p292 = pneg %p194
      $region34: #{_lambda_.1} parent=11 // pred_check_branch
        %294 = sbr.rel (%p292) target = $region36
      $region35: #{_lambda_.1} parent=11 // pred_region
        _
      $region36: #{_lambda_.1} parent=11 // pred_fallthru
        _
      // Predicated region
      $region37: #{_lambda_.1} parent=11 // pred_check
        %p295 = pneg %p215
      $region38: #{_lambda_.1} parent=11 // pred_check_branch
        %297 = sbr.rel (%p295) target = $region40
      $region39: #{_lambda_.1} parent=11 // pred_region
        _
      $region40: #{_lambda_.1} parent=11 // pred_fallthru
        _
      // Predicated region
      $region41: #{_lambda_.1} parent=11 // pred_check
        %p298 = pneg %p236
      $region42: #{_lambda_.1} parent=11 // pred_check_branch
        %300 = sbr.rel (%p298) target = $region44
      $region43: #{_lambda_.1} parent=11 // pred_region
        _
      $region44: #{_lambda_.1} parent=11 // pred_fallthru
        _
    $region12: #{_lambda_.1} parent=5 // pred_fallthru
      _
    %p301 = scmp.lt.s32.totalorder %s16, 8
    // Predicated region
    $region45: #{_lambda_.1} parent=5 // pred_check
      %p302 = pneg %p301
    $region46: #{_lambda_.1} parent=5 // pred_check_branch
      %304 = sbr.rel (%p302) target = $region48
    $region47: #{_lambda_.1} parent=5 // pred_region
      // Predicated region
      $region49: #{_lambda_.1} parent=47 // pred_check
        %p305 = pneg %p36
      $region50: #{_lambda_.1} parent=47 // pred_check_branch
        %307 = sbr.rel (%p305) target = $region52
      $region51: #{_lambda_.1} parent=47 // pred_region
        %s308 = smul.u32 32, %s16
        %p309 = scmp.lt.s32.totalorder %s308, 255
        %s310 = scalar_select %p309, %s308, 255
        %s311 = smul.addr %s310, 8
        %s312 = scalar_lea.vmem %s0, %s311
        %s313 = smul.u32 32, %s16
      $region52: #{_lambda_.1} parent=47 // pred_fallthru
        _
      // Predicated region
      $region53: #{_lambda_.1} parent=47 // pred_check
        %p314 = pneg %p62
      $region54: #{_lambda_.1} parent=47 // pred_check_branch
        %316 = sbr.rel (%p314) target = $region56
      $region55: #{_lambda_.1} parent=47 // pred_region
        %s317 = smul.u32 32, %s16
        %p318 = scmp.lt.s32.totalorder %s317, 255
        %s319 = scalar_select %p318, %s317, 255
        %s320 = smul.addr %s319, 8
        %s321 = scalar_lea.vmem %s1, %s320
        %s322 = smul.u32 32, %s16
      $region56: #{_lambda_.1} parent=47 // pred_fallthru
        _
    $region48: #{_lambda_.1} parent=5 // pred_fallthru
      _
    %p323 = scmp.le.s32.totalorder 1, %s16
    %p324 = scmp.lt.s32.totalorder %s16, 9
    %p325 = pnand %p323, %p324
    %p326 = pneg %p325
    // Predicated region
    $region57: #{_lambda_.1} parent=5 // pred_check
      _
    $region58: #{_lambda_.1} parent=5 // pred_check_branch
      %328 = sbr.rel (%p325) target = $region60
    $region59: #{_lambda_.1} parent=5 // pred_region
      %s329 = ssub.s32 %s16, 1
      %s330 = smul.u32 32, %s21
      %p331 = scmp.lt.s32.totalorder %s330, 255
      %s332 = scalar_select %p331, %s330, 255
      %s333 = smul.addr %s332, 8
      %s334 = scalar_lea.vmem %s0, %s333
      %p335 = pneg %p42
      %p336 = pneg %p39
      %s337 = smul.u32 32, %s21
      %p338 = scmp.lt.s32.totalorder %s337, 255
      %s339 = scalar_select %p338, %s337, 255
      %s340 = smul.addr %s339, 8
      %s341 = scalar_lea.vmem %s1, %s340
      %p342 = pneg %p68
      %p343 = pneg %p65
      %p344 = pneg %p89
      %p345 = pneg %p86
      %p346 = pneg %p110
      %p347 = pneg %p107
      %p348 = pneg %p131
      %p349 = pneg %p128
      %p350 = pneg %p152
      %p351 = pneg %p149
      %p352 = pneg %p173
      %p353 = pneg %p170
      %p354 = pneg %p194
      %p355 = pneg %p191
      %p356 = pneg %p215
      %p357 = pneg %p212
      %p358 = pneg %p236
      %p359 = pneg %p233
      %p360 = pneg %p262
      %p361 = pneg %p259
      %s362 = smul.u32 32, %s21
      %p363 = scmp.lt.s32.totalorder %s362, 255
      %s364 = scalar_select %p363, %s362, 255
      %s365 = smul.addr %s364, 8
      %s366 = scalar_lea.vmem %s10, %s365
      %s367 = smul.u32 32, %s21
      %p368 = scmp.lt.s32.totalorder %s367, 255
      %s369 = scalar_select %p368, %s367, 255
      %s370 = smul.addr %s369, 8
      %s371 = scalar_lea.vmem %s0, %s370
      %s372 = smul.u32 32, %s21
      %s373 = smul.u32 32, %s21
      %p374 = scmp.lt.s32.totalorder %s373, 255
      %s375 = scalar_select %p374, %s373, 255
      %s376 = smul.addr %s375, 8
      %s377 = scalar_lea.vmem %s1, %s376
      %s378 = smul.u32 32, %s21
      %s379 = smul.u32 32, %s21
      %p380 = scmp.lt.s32.totalorder %s379, 255
      %s381 = scalar_select %p380, %s379, 255
      %s382 = smul.addr %s381, 8
      %s383 = scalar_lea.vmem %s10, %s382
      %s384 = smul.u32 32, %s21
      %v386 = vld [vmem:[%s371] sm:$0xff]
      %v387 = vld [vmem:[%s371 + $0x8] sm:$0xff]
      %v388 = vld [vmem:[%s371 + $0x10] sm:$0xff]
      %v389 = vld [vmem:[%s371 + $0x18] sm:$0xff]
      %v390 = vld [vmem:[%s371 + $0x20] sm:$0xff]
      %v391 = vld [vmem:[%s371 + $0x28] sm:$0xff]
      %v392 = vld [vmem:[%s371 + $0x30] sm:$0xff]
      %v393 = vld [vmem:[%s371 + $0x38] sm:$0xff]
      %v394 = vld [vmem:[%s371 + $0x40] sm:$0xff]
      %v395 = vld [vmem:[%s371 + $0x48] sm:$0xff]
      %v396 = vld [vmem:[%s371 + $0x50] sm:$0xff]
      %v397 = vld [vmem:[%s371 + $0x58] sm:$0xff]
      %v398 = vld [vmem:[%s371 + $0x60] sm:$0xff]
      %v399 = vld [vmem:[%s371 + $0x68] sm:$0xff]
      %v400 = vld [vmem:[%s371 + $0x70] sm:$0xff]
      %v401 = vld [vmem:[%s371 + $0x78] sm:$0xff]
      %v402 = vld [vmem:[%s371 + $0x80] sm:$0xff]
      %v403 = vld [vmem:[%s371 + $0x88] sm:$0xff]
      %v404 = vld [vmem:[%s371 + $0x90] sm:$0xff]
      %v405 = vld [vmem:[%s371 + $0x98] sm:$0xff]
      %v406 = vld [vmem:[%s371 + $0xa0] sm:$0xff]
      %v407 = vld [vmem:[%s371 + $0xa8] sm:$0xff]
      %v408 = vld [vmem:[%s371 + $0xb0] sm:$0xff]
      %v409 = vld [vmem:[%s371 + $0xb8] sm:$0xff]
      %v410 = vld [vmem:[%s371 + $0xc0] sm:$0xff]
      %v411 = vld [vmem:[%s371 + $0xc8] sm:$0xff]
      %v412 = vld [vmem:[%s371 + $0xd0] sm:$0xff]
      %v413 = vld [vmem:[%s371 + $0xd8] sm:$0xff]
      %v414 = vld [vmem:[%s371 + $0xe0] sm:$0xff]
      %v415 = vld [vmem:[%s371 + $0xe8] sm:$0xff]
      %v416 = vld [vmem:[%s371 + $0xf0] sm:$0xff]
      %v417 = vld [vmem:[%s371 + $0xf8] sm:$0xff]
      %v418 = vpack.c.bf16 %v387, %v386
      %v419 = vpack.c.bf16 %v389, %v388
      %v420 = vpack.c.bf16 %v391, %v390
      %v421 = vpack.c.bf16 %v393, %v392
      %v422 = vpack.c.bf16 %v395, %v394
      %v423 = vpack.c.bf16 %v397, %v396
      %v424 = vpack.c.bf16 %v399, %v398
      %v425 = vpack.c.bf16 %v401, %v400
      %v426 = vpack.c.bf16 %v403, %v402
      %v427 = vpack.c.bf16 %v405, %v404
      %v428 = vpack.c.bf16 %v407, %v406
      %v429 = vpack.c.bf16 %v409, %v408
      %v430 = vpack.c.bf16 %v411, %v410
      %v431 = vpack.c.bf16 %v413, %v412
      %v432 = vpack.c.bf16 %v415, %v414
      %v433 = vpack.c.bf16 %v417, %v416
      %v434 = vld [vmem:[%s2] sm:$0x3]
      %v435 = vld [vmem:[%s3] sm:$0x1]
      %v437 = vlaneseq
      %v438 = vshrl.u32 %v437, 7
      %v439 = vsub.s32 0, %v438
      %v440 = vrot.slane %v435, %v439
      %vm442 = vcmask 31744
      %v444 = vsel %vm442, %v418, 0
      %v447 = vsel %vm442, %v419, 0
      %v450 = vsel %vm442, %v420, 0
      %v453 = vsel %vm442, %v421, 0
      %v456 = vsel %vm442, %v422, 0
      %v459 = vsel %vm442, %v423, 0
      %v462 = vsel %vm442, %v424, 0
      %v465 = vsel %vm442, %v425, 0
      %v468 = vsel %vm442, %v426, 0
      %v471 = vsel %vm442, %v427, 0
      %v474 = vsel %vm442, %v428, 0
      %v477 = vsel %vm442, %v429, 0
      %v480 = vsel %vm442, %v430, 0
      %v483 = vsel %vm442, %v431, 0
      %v486 = vsel %vm442, %v432, 0
      %v489 = vsel %vm442, %v433, 0
      %vm491 = vcmask 1041408
      %v493 = vsel %vm491, %v434, 0
      %495 = vmatprep.subr.bf16.mxu0 0
      %496 = vmatpush1.bf16.msra.mxu0 0
      %497 = vmatprep.subr.bf16.mxu0 0
      %498 = vmatpush1.bf16.msra.mxu0 0
      %499 = vmatprep.subr.bf16.mxu0 0
      %500 = vmatpush1.bf16.msra.mxu0 0
      %501 = vmatprep.subr.bf16.mxu0 0
      %502 = vmatpush1.bf16.msra.mxu0 0
      %503 = vmatprep.subr.bf16.mxu0 0
      %504 = vmatpush1.bf16.msra.mxu0 0
      %505 = vmatprep.subr.bf16.mxu0 0
      %506 = vmatpush1.bf16.msra.mxu0 0
      %507 = vmatprep.subr.bf16.mxu0 0
      %508 = vmatpush1.bf16.msra.mxu0 0
      %509 = vmatprep.subr.bf16.mxu0 0
      %510 = vmatpush1.bf16.msra.mxu0 %v493
      %511 = vmatprep.subr.bf16.mxu0 0
      %512 = vmatpush2.bf16.msra.mxu0 0
      %513 = vmatprep.subr.bf16.mxu0 0
      %514 = vmatpush2.bf16.msra.mxu0 0
      %515 = vmatprep.subr.bf16.mxu0 0
      %516 = vmatpush2.bf16.msra.mxu0 0
      %517 = vmatprep.subr.bf16.mxu0 0
      %518 = vmatpush2.bf16.msra.mxu0 0
      %519 = vmatprep.subr.bf16.mxu0 0
      %520 = vmatpush2.bf16.msra.mxu0 0
      %521 = vmatprep.subr.bf16.mxu0 0
      %522 = vmatpush2.bf16.msra.mxu0 0
      %523 = vmatprep.subr.bf16.mxu0 0
      %524 = vmatpush2.bf16.msra.mxu0 0
      %525 = vmatprep.subr.bf16.mxu0 0
      %526 = vmatpush2.bf16.msra.mxu0 0
      %527 = vmatprep.mubr.bf16.mxu0 0
      %528 = vmatmul.mubr.bf16.gmra.mxu0 %v444
      %v529 = vpop.f32.mrf.mxu0
      %v530 = vadd.f32 %v440, %v529
      %v531 = vpop.f32.mrf.mxu0
      %v532 = vpop.f32.mrf.mxu0
      %v533 = vadd.f32 %v440, %v532
      %v534 = vpop.f32.mrf.mxu0
      %535 = vmatprep.mubr.bf16.mxu0 0
      %536 = vmatmul.mubr.bf16.gmra.mxu0 %v447
      %v537 = vpop.f32.mrf.mxu0
      %v538 = vadd.f32 %v440, %v537
      %v539 = vpop.f32.mrf.mxu0
      %v540 = vpop.f32.mrf.mxu0
      %v541 = vadd.f32 %v440, %v540
      %v542 = vpop.f32.mrf.mxu0
      %543 = vmatprep.mubr.bf16.mxu0 0
      %544 = vmatmul.mubr.bf16.gmra.mxu0 %v450
      %v545 = vpop.f32.mrf.mxu0
      %v546 = vadd.f32 %v440, %v545
      %v547 = vpop.f32.mrf.mxu0
      %v548 = vpop.f32.mrf.mxu0
      %v549 = vadd.f32 %v440, %v548
      %v550 = vpop.f32.mrf.mxu0
      %551 = vmatprep.mubr.bf16.mxu0 0
      %552 = vmatmul.mubr.bf16.gmra.mxu0 %v453
      %v553 = vpop.f32.mrf.mxu0
      %v554 = vadd.f32 %v440, %v553
      %v555 = vpop.f32.mrf.mxu0
      %v556 = vpop.f32.mrf.mxu0
      %v557 = vadd.f32 %v440, %v556
      %v558 = vpop.f32.mrf.mxu0
      %559 = vmatprep.mubr.bf16.mxu0 0
      %560 = vmatmul.mubr.bf16.gmra.mxu0 %v456
      %v561 = vpop.f32.mrf.mxu0
      %v562 = vadd.f32 %v440, %v561
      %v563 = vpop.f32.mrf.mxu0
      %v564 = vpop.f32.mrf.mxu0
      %v565 = vadd.f32 %v440, %v564
      %v566 = vpop.f32.mrf.mxu0
      %567 = vmatprep.mubr.bf16.mxu0 0
      %568 = vmatmul.mubr.bf16.gmra.mxu0 %v459
      %v569 = vpop.f32.mrf.mxu0
      %v570 = vadd.f32 %v440, %v569
      %v571 = vpop.f32.mrf.mxu0
      %v572 = vpop.f32.mrf.mxu0
      %v573 = vadd.f32 %v440, %v572
      %v574 = vpop.f32.mrf.mxu0
      %575 = vmatprep.mubr.bf16.mxu0 0
      %576 = vmatmul.mubr.bf16.gmra.mxu0 %v462
      %v577 = vpop.f32.mrf.mxu0
      %v578 = vadd.f32 %v440, %v577
      %v579 = vpop.f32.mrf.mxu0
      %v580 = vpop.f32.mrf.mxu0
      %v581 = vadd.f32 %v440, %v580
      %v582 = vpop.f32.mrf.mxu0
      %583 = vmatprep.mubr.bf16.mxu0 0
      %584 = vmatmul.mubr.bf16.gmra.mxu0 %v465
      %v585 = vpop.f32.mrf.mxu0
      %v586 = vadd.f32 %v440, %v585
      %v587 = vpop.f32.mrf.mxu0
      %v588 = vpop.f32.mrf.mxu0
      %v589 = vadd.f32 %v440, %v588
      %v590 = vpop.f32.mrf.mxu0
      %591 = vmatprep.mubr.bf16.mxu0 0
      %592 = vmatmul.mubr.bf16.gmra.mxu0 %v468
      %v593 = vpop.f32.mrf.mxu0
      %v594 = vadd.f32 %v440, %v593
      %v595 = vpop.f32.mrf.mxu0
      %v596 = vpop.f32.mrf.mxu0
      %v597 = vadd.f32 %v440, %v596
      %v598 = vpop.f32.mrf.mxu0
      %599 = vmatprep.mubr.bf16.mxu0 0
      %600 = vmatmul.mubr.bf16.gmra.mxu0 %v471
      %v601 = vpop.f32.mrf.mxu0
      %v602 = vadd.f32 %v440, %v601
      %v603 = vpop.f32.mrf.mxu0
      %v604 = vpop.f32.mrf.mxu0
      %v605 = vadd.f32 %v440, %v604
      %v606 = vpop.f32.mrf.mxu0
      %607 = vmatprep.mubr.bf16.mxu0 0
      %608 = vmatmul.mubr.bf16.gmra.mxu0 %v474
      %v609 = vpop.f32.mrf.mxu0
      %v610 = vadd.f32 %v440, %v609
      %v611 = vpop.f32.mrf.mxu0
      %v612 = vpop.f32.mrf.mxu0
      %v613 = vadd.f32 %v440, %v612
      %v614 = vpop.f32.mrf.mxu0
      %615 = vmatprep.mubr.bf16.mxu0 0
      %616 = vmatmul.mubr.bf16.gmra.mxu0 %v477
      %v617 = vpop.f32.mrf.mxu0
      %v618 = vadd.f32 %v440, %v617
      %v619 = vpop.f32.mrf.mxu0
      %v620 = vpop.f32.mrf.mxu0
      %v621 = vadd.f32 %v440, %v620
      %v622 = vpop.f32.mrf.mxu0
      %623 = vmatprep.mubr.bf16.mxu0 0
      %624 = vmatmul.mubr.bf16.gmra.mxu0 %v480
      %v625 = vpop.f32.mrf.mxu0
      %v626 = vadd.f32 %v440, %v625
      %v627 = vpop.f32.mrf.mxu0
      %v628 = vpop.f32.mrf.mxu0
      %v629 = vadd.f32 %v440, %v628
      %v630 = vpop.f32.mrf.mxu0
      %631 = vmatprep.mubr.bf16.mxu0 0
      %632 = vmatmul.mubr.bf16.gmra.mxu0 %v483
      %v633 = vpop.f32.mrf.mxu0
      %v634 = vadd.f32 %v440, %v633
      %v635 = vpop.f32.mrf.mxu0
      %v636 = vpop.f32.mrf.mxu0
      %v637 = vadd.f32 %v440, %v636
      %v638 = vpop.f32.mrf.mxu0
      %639 = vmatprep.mubr.bf16.mxu0 0
      %640 = vmatmul.mubr.bf16.gmra.mxu0 %v486
      %v641 = vpop.f32.mrf.mxu0
      %v642 = vadd.f32 %v440, %v641
      %v643 = vpop.f32.mrf.mxu0
      %v644 = vpop.f32.mrf.mxu0
      %v645 = vadd.f32 %v440, %v644
      %v646 = vpop.f32.mrf.mxu0
      %647 = vmatprep.mubr.bf16.mxu0 0
      %648 = vmatmul.mubr.bf16.gmra.mxu0 %v489
      %v649 = vpop.f32.mrf.mxu0
      %v650 = vadd.f32 %v440, %v649
      %v651 = vpop.f32.mrf.mxu0
      %v652 = vpop.f32.mrf.mxu0
      %v653 = vadd.f32 %v440, %v652
      %v654 = vpop.f32.mrf.mxu0
      %655 = vdwg.mxu0
      %v656 = vmax.f32 %v530, 0.0
      %v657 = vmax.f32 %v533, 0.0
      %v658 = vmax.f32 %v538, 0.0
      %v659 = vmax.f32 %v541, 0.0
      %v660 = vmax.f32 %v546, 0.0
      %v661 = vmax.f32 %v549, 0.0
      %v662 = vmax.f32 %v554, 0.0
      %v663 = vmax.f32 %v557, 0.0
      %v664 = vmax.f32 %v562, 0.0
      %v665 = vmax.f32 %v565, 0.0
      %v666 = vmax.f32 %v570, 0.0
      %v667 = vmax.f32 %v573, 0.0
      %v668 = vmax.f32 %v578, 0.0
      %v669 = vmax.f32 %v581, 0.0
      %v670 = vmax.f32 %v586, 0.0
      %v671 = vmax.f32 %v589, 0.0
      %v672 = vmax.f32 %v594, 0.0
      %v673 = vmax.f32 %v597, 0.0
      %v674 = vmax.f32 %v602, 0.0
      %v675 = vmax.f32 %v605, 0.0
      %v676 = vmax.f32 %v610, 0.0
      %v677 = vmax.f32 %v613, 0.0
      %v678 = vmax.f32 %v618, 0.0
      %v679 = vmax.f32 %v621, 0.0
      %v680 = vmax.f32 %v626, 0.0
      %v681 = vmax.f32 %v629, 0.0
      %v682 = vmax.f32 %v634, 0.0
      %v683 = vmax.f32 %v637, 0.0
      %v684 = vmax.f32 %v642, 0.0
      %v685 = vmax.f32 %v645, 0.0
      %v686 = vmax.f32 %v650, 0.0
      %v687 = vmax.f32 %v653, 0.0
      %v688 = vpack.c.bf16 %v657, %v656
      %v689 = vpack.c.bf16 %v659, %v658
      %v690 = vpack.c.bf16 %v661, %v660
      %v691 = vpack.c.bf16 %v663, %v662
      %v692 = vpack.c.bf16 %v665, %v664
      %v693 = vpack.c.bf16 %v667, %v666
      %v694 = vpack.c.bf16 %v669, %v668
      %v695 = vpack.c.bf16 %v671, %v670
      %v696 = vpack.c.bf16 %v673, %v672
      %v697 = vpack.c.bf16 %v675, %v674
      %v698 = vpack.c.bf16 %v677, %v676
      %v699 = vpack.c.bf16 %v679, %v678
      %v700 = vpack.c.bf16 %v681, %v680
      %v701 = vpack.c.bf16 %v683, %v682
      %v702 = vpack.c.bf16 %v685, %v684
      %v703 = vpack.c.bf16 %v687, %v686
      %v704 = vld [vmem:[%s4] sm:$0xff]
      %v705 = vld [vmem:[%s4 + $0x8] sm:$0xff]
      %v706 = vld [vmem:[%s4 + $0x10] sm:$0xff]
      %v707 = vld [vmem:[%s4 + $0x18] sm:$0xff]
      %v708 = vld [vmem:[%s4 + $0x20] sm:$0xff]
      %v709 = vld [vmem:[%s4 + $0x28] sm:$0xff]
      %v710 = vld [vmem:[%s4 + $0x30] sm:$0xff]
      %v711 = vld [vmem:[%s4 + $0x38] sm:$0xff]
      %v712 = vld [vmem:[%s4 + $0x40] sm:$0xff]
      %v713 = vld [vmem:[%s4 + $0x48] sm:$0xff]
      %v714 = vld [vmem:[%s4 + $0x50] sm:$0xff]
      %v715 = vld [vmem:[%s4 + $0x58] sm:$0xff]
      %v716 = vld [vmem:[%s4 + $0x60] sm:$0xff]
      %v717 = vld [vmem:[%s4 + $0x68] sm:$0xff]
      %v718 = vld [vmem:[%s4 + $0x70] sm:$0xff]
      %v719 = vld [vmem:[%s4 + $0x78] sm:$0xff]
      %v720 = vld [vmem:[%s5] sm:$0x3]
      %v722 = vlaneseq
      %v723 = vshrl.u32 %v722, 7
      %v724 = vsub.s32 0, %v723
      %v725 = vrot.slane %v720, %v724
      %v726 = vlaneseq
      %v727 = vshrl.u32 %v726, 7
      %v728 = vsub.s32 1, %v727
      %v729 = vrot.slane %v720, %v728
      %v748 = vunpack.c.l.b16 %v704
      %v749 = vunpack.c.h.b16 %v704
      %v750 = vunpack.c.l.b16 %v705
      %v751 = vunpack.c.h.b16 %v705
      %v752 = vunpack.c.l.b16 %v706
      %v753 = vunpack.c.h.b16 %v706
      %v754 = vunpack.c.l.b16 %v707
      %v755 = vunpack.c.h.b16 %v707
      %v756 = vunpack.c.l.b16 %v708
      %v757 = vunpack.c.h.b16 %v708
      %v758 = vunpack.c.l.b16 %v709
      %v759 = vunpack.c.h.b16 %v709
      %v760 = vunpack.c.l.b16 %v710
      %v761 = vunpack.c.h.b16 %v710
      %v762 = vunpack.c.l.b16 %v711
      %v763 = vunpack.c.h.b16 %v711
      %v764 = vunpack.c.l.b16 %v712
      %v765 = vunpack.c.h.b16 %v712
      %v766 = vunpack.c.l.b16 %v713
      %v767 = vunpack.c.h.b16 %v713
      %v768 = vunpack.c.l.b16 %v714
      %v769 = vunpack.c.h.b16 %v714
      %v770 = vunpack.c.l.b16 %v715
      %v771 = vunpack.c.h.b16 %v715
      %v772 = vunpack.c.l.b16 %v716
      %v773 = vunpack.c.h.b16 %v716
      %v774 = vunpack.c.l.b16 %v717
      %v775 = vunpack.c.h.b16 %v717
      %v776 = vunpack.c.l.b16 %v718
      %v777 = vunpack.c.h.b16 %v718
      %v778 = vunpack.c.l.b16 %v719
      %v779 = vunpack.c.h.b16 %v719
      %v780 = vpack.c.b16 %v750, %v748
      %v781 = vpack.c.b16 %v751, %v749
      %v782 = vpack.c.b16 %v754, %v752
      %v783 = vpack.c.b16 %v755, %v753
      %v784 = vpack.c.b16 %v758, %v756
      %v785 = vpack.c.b16 %v759, %v757
      %v786 = vpack.c.b16 %v762, %v760
      %v787 = vpack.c.b16 %v763, %v761
      %v788 = vpack.c.b16 %v766, %v764
      %v789 = vpack.c.b16 %v767, %v765
      %v790 = vpack.c.b16 %v770, %v768
      %v791 = vpack.c.b16 %v771, %v769
      %v792 = vpack.c.b16 %v774, %v772
      %v793 = vpack.c.b16 %v775, %v773
      %v794 = vpack.c.b16 %v778, %v776
      %v795 = vpack.c.b16 %v779, %v777
      %812 = vmatprep.subr.bf16.mxu0 %v795
      %813 = vmatpush1.bf16.msra.mxu0 %v794
      %814 = vmatprep.subr.bf16.mxu0 %v793
      %815 = vmatpush1.bf16.msra.mxu0 %v792
      %816 = vmatprep.subr.bf16.mxu0 %v791
      %817 = vmatpush1.bf16.msra.mxu0 %v790
      %818 = vmatprep.subr.bf16.mxu0 %v789
      %819 = vmatpush1.bf16.msra.mxu0 %v788
      %820 = vmatprep.subr.bf16.mxu0 %v787
      %821 = vmatpush1.bf16.msra.mxu0 %v786
      %822 = vmatprep.subr.bf16.mxu0 %v785
      %823 = vmatpush1.bf16.msra.mxu0 %v784
      %824 = vmatprep.subr.bf16.mxu0 %v783
      %825 = vmatpush1.bf16.msra.mxu0 %v782
      %826 = vmatprep.subr.bf16.mxu0 %v781
      %827 = vmatpush1.bf16.msra.mxu0 %v780
      %828 = vmatprep.subr.bf16.mxu0 0
      %829 = vmatpush2.bf16.msra.mxu0 0
      %830 = vmatprep.subr.bf16.mxu0 0
      %831 = vmatpush2.bf16.msra.mxu0 0
      %832 = vmatprep.subr.bf16.mxu0 0
      %833 = vmatpush2.bf16.msra.mxu0 0
      %834 = vmatprep.subr.bf16.mxu0 0
      %835 = vmatpush2.bf16.msra.mxu0 0
      %836 = vmatprep.subr.bf16.mxu0 0
      %837 = vmatpush2.bf16.msra.mxu0 0
      %838 = vmatprep.subr.bf16.mxu0 0
      %839 = vmatpush2.bf16.msra.mxu0 0
      %840 = vmatprep.subr.bf16.mxu0 0
      %841 = vmatpush2.bf16.msra.mxu0 0
      %842 = vmatprep.subr.bf16.mxu0 0
      %843 = vmatpush2.bf16.msra.mxu0 0
      %844 = vmatprep.mubr.bf16.mxu0 0
      %845 = vmatmul.mubr.bf16.gmra.mxu0 %v688
      %v846 = vpop.f32.mrf.mxu0
      %v847 = vadd.f32 %v725, %v846
      %v848 = vpop.f32.mrf.mxu0
      %v849 = vadd.f32 %v729, %v848
      %v850 = vpop.f32.mrf.mxu0
      %v851 = vadd.f32 %v725, %v850
      %v852 = vpop.f32.mrf.mxu0
      %v853 = vadd.f32 %v729, %v852
      %854 = vmatprep.mubr.bf16.mxu0 0
      %855 = vmatmul.mubr.bf16.gmra.mxu0 %v689
      %v856 = vpop.f32.mrf.mxu0
      %v857 = vadd.f32 %v725, %v856
      %v858 = vpop.f32.mrf.mxu0
      %v859 = vadd.f32 %v729, %v858
      %v860 = vpop.f32.mrf.mxu0
      %v861 = vadd.f32 %v725, %v860
      %v862 = vpop.f32.mrf.mxu0
      %v863 = vadd.f32 %v729, %v862
      %864 = vmatprep.mubr.bf16.mxu0 0
      %865 = vmatmul.mubr.bf16.gmra.mxu0 %v690
      %v866 = vpop.f32.mrf.mxu0
      %v867 = vadd.f32 %v725, %v866
      %v868 = vpop.f32.mrf.mxu0
      %v869 = vadd.f32 %v729, %v868
      %v870 = vpop.f32.mrf.mxu0
      %v871 = vadd.f32 %v725, %v870
      %v872 = vpop.f32.mrf.mxu0
      %v873 = vadd.f32 %v729, %v872
      %874 = vmatprep.mubr.bf16.mxu0 0
      %875 = vmatmul.mubr.bf16.gmra.mxu0 %v691
      %v876 = vpop.f32.mrf.mxu0
      %v877 = vadd.f32 %v725, %v876
      %v878 = vpop.f32.mrf.mxu0
      %v879 = vadd.f32 %v729, %v878
      %v880 = vpop.f32.mrf.mxu0
      %v881 = vadd.f32 %v725, %v880
      %v882 = vpop.f32.mrf.mxu0
      %v883 = vadd.f32 %v729, %v882
      %884 = vmatprep.mubr.bf16.mxu0 0
      %885 = vmatmul.mubr.bf16.gmra.mxu0 %v692
      %v886 = vpop.f32.mrf.mxu0
      %v887 = vadd.f32 %v725, %v886
      %v888 = vpop.f32.mrf.mxu0
      %v889 = vadd.f32 %v729, %v888
      %v890 = vpop.f32.mrf.mxu0
      %v891 = vadd.f32 %v725, %v890
      %v892 = vpop.f32.mrf.mxu0
      %v893 = vadd.f32 %v729, %v892
      %894 = vmatprep.mubr.bf16.mxu0 0
      %895 = vmatmul.mubr.bf16.gmra.mxu0 %v693
      %v896 = vpop.f32.mrf.mxu0
      %v897 = vadd.f32 %v725, %v896
      %v898 = vpop.f32.mrf.mxu0
      %v899 = vadd.f32 %v729, %v898
      %v900 = vpop.f32.mrf.mxu0
      %v901 = vadd.f32 %v725, %v900
      %v902 = vpop.f32.mrf.mxu0
      %v903 = vadd.f32 %v729, %v902
      %904 = vmatprep.mubr.bf16.mxu0 0
      %905 = vmatmul.mubr.bf16.gmra.mxu0 %v694
      %v906 = vpop.f32.mrf.mxu0
      %v907 = vadd.f32 %v725, %v906
      %v908 = vpop.f32.mrf.mxu0
      %v909 = vadd.f32 %v729, %v908
      %v910 = vpop.f32.mrf.mxu0
      %v911 = vadd.f32 %v725, %v910
      %v912 = vpop.f32.mrf.mxu0
      %v913 = vadd.f32 %v729, %v912
      %914 = vmatprep.mubr.bf16.mxu0 0
      %915 = vmatmul.mubr.bf16.gmra.mxu0 %v695
      %v916 = vpop.f32.mrf.mxu0
      %v917 = vadd.f32 %v725, %v916
      %v918 = vpop.f32.mrf.mxu0
      %v919 = vadd.f32 %v729, %v918
      %v920 = vpop.f32.mrf.mxu0
      %v921 = vadd.f32 %v725, %v920
      %v922 = vpop.f32.mrf.mxu0
      %v923 = vadd.f32 %v729, %v922
      %924 = vmatprep.mubr.bf16.mxu0 0
      %925 = vmatmul.mubr.bf16.gmra.mxu0 %v696
      %v926 = vpop.f32.mrf.mxu0
      %v927 = vadd.f32 %v725, %v926
      %v928 = vpop.f32.mrf.mxu0
      %v929 = vadd.f32 %v729, %v928
      %v930 = vpop.f32.mrf.mxu0
      %v931 = vadd.f32 %v725, %v930
      %v932 = vpop.f32.mrf.mxu0
      %v933 = vadd.f32 %v729, %v932
      %934 = vmatprep.mubr.bf16.mxu0 0
      %935 = vmatmul.mubr.bf16.gmra.mxu0 %v697
      %v936 = vpop.f32.mrf.mxu0
      %v937 = vadd.f32 %v725, %v936
      %v938 = vpop.f32.mrf.mxu0
      %v939 = vadd.f32 %v729, %v938
      %v940 = vpop.f32.mrf.mxu0
      %v941 = vadd.f32 %v725, %v940
      %v942 = vpop.f32.mrf.mxu0
      %v943 = vadd.f32 %v729, %v942
      %944 = vmatprep.mubr.bf16.mxu0 0
      %945 = vmatmul.mubr.bf16.gmra.mxu0 %v698
      %v946 = vpop.f32.mrf.mxu0
      %v947 = vadd.f32 %v725, %v946
      %v948 = vpop.f32.mrf.mxu0
      %v949 = vadd.f32 %v729, %v948
      %v950 = vpop.f32.mrf.mxu0
      %v951 = vadd.f32 %v725, %v950
      %v952 = vpop.f32.mrf.mxu0
      %v953 = vadd.f32 %v729, %v952
      %954 = vmatprep.mubr.bf16.mxu0 0
      %955 = vmatmul.mubr.bf16.gmra.mxu0 %v699
      %v956 = vpop.f32.mrf.mxu0
      %v957 = vadd.f32 %v725, %v956
      %v958 = vpop.f32.mrf.mxu0
      %v959 = vadd.f32 %v729, %v958
      %v960 = vpop.f32.mrf.mxu0
      %v961 = vadd.f32 %v725, %v960
      %v962 = vpop.f32.mrf.mxu0
      %v963 = vadd.f32 %v729, %v962
      %964 = vmatprep.mubr.bf16.mxu0 0
      %965 = vmatmul.mubr.bf16.gmra.mxu0 %v700
      %v966 = vpop.f32.mrf.mxu0
      %v967 = vadd.f32 %v725, %v966
      %v968 = vpop.f32.mrf.mxu0
      %v969 = vadd.f32 %v729, %v968
      %v970 = vpop.f32.mrf.mxu0
      %v971 = vadd.f32 %v725, %v970
      %v972 = vpop.f32.mrf.mxu0
      %v973 = vadd.f32 %v729, %v972
      %974 = vmatprep.mubr.bf16.mxu0 0
      %975 = vmatmul.mubr.bf16.gmra.mxu0 %v701
      %v976 = vpop.f32.mrf.mxu0
      %v977 = vadd.f32 %v725, %v976
      %v978 = vpop.f32.mrf.mxu0
      %v979 = vadd.f32 %v729, %v978
      %v980 = vpop.f32.mrf.mxu0
      %v981 = vadd.f32 %v725, %v980
      %v982 = vpop.f32.mrf.mxu0
      %v983 = vadd.f32 %v729, %v982
      %984 = vmatprep.mubr.bf16.mxu0 0
      %985 = vmatmul.mubr.bf16.gmra.mxu0 %v702
      %v986 = vpop.f32.mrf.mxu0
      %v987 = vadd.f32 %v725, %v986
      %v988 = vpop.f32.mrf.mxu0
      %v989 = vadd.f32 %v729, %v988
      %v990 = vpop.f32.mrf.mxu0
      %v991 = vadd.f32 %v725, %v990
      %v992 = vpop.f32.mrf.mxu0
      %v993 = vadd.f32 %v729, %v992
      %994 = vmatprep.mubr.bf16.mxu0 0
      %995 = vmatmul.mubr.bf16.gmra.mxu0 %v703
      %v996 = vpop.f32.mrf.mxu0
      %v997 = vadd.f32 %v725, %v996
      %v998 = vpop.f32.mrf.mxu0
      %v999 = vadd.f32 %v729, %v998
      %v1000 = vpop.f32.mrf.mxu0
      %v1001 = vadd.f32 %v725, %v1000
      %v1002 = vpop.f32.mrf.mxu0
      %v1003 = vadd.f32 %v729, %v1002
      %1004 = vdwg.mxu0
      %v1005 = vmax.f32 %v847, 0.0
      %v1006 = vmax.f32 %v849, 0.0
      %v1007 = vmax.f32 %v851, 0.0
      %v1008 = vmax.f32 %v853, 0.0
      %v1009 = vmax.f32 %v857, 0.0
      %v1010 = vmax.f32 %v859, 0.0
      %v1011 = vmax.f32 %v861, 0.0
      %v1012 = vmax.f32 %v863, 0.0
      %v1013 = vmax.f32 %v867, 0.0
      %v1014 = vmax.f32 %v869, 0.0
      %v1015 = vmax.f32 %v871, 0.0
      %v1016 = vmax.f32 %v873, 0.0
      %v1017 = vmax.f32 %v877, 0.0
      %v1018 = vmax.f32 %v879, 0.0
      %v1019 = vmax.f32 %v881, 0.0
      %v1020 = vmax.f32 %v883, 0.0
      %v1021 = vmax.f32 %v887, 0.0
      %v1022 = vmax.f32 %v889, 0.0
      %v1023 = vmax.f32 %v891, 0.0
      %v1024 = vmax.f32 %v893, 0.0
      %v1025 = vmax.f32 %v897, 0.0
      %v1026 = vmax.f32 %v899, 0.0
      %v1027 = vmax.f32 %v901, 0.0
      %v1028 = vmax.f32 %v903, 0.0
      %v1029 = vmax.f32 %v907, 0.0
      %v1030 = vmax.f32 %v909, 0.0
      %v1031 = vmax.f32 %v911, 0.0
      %v1032 = vmax.f32 %v913, 0.0
      %v1033 = vmax.f32 %v917, 0.0
      %v1034 = vmax.f32 %v919, 0.0
      %v1035 = vmax.f32 %v921, 0.0
      %v1036 = vmax.f32 %v923, 0.0
      %v1037 = vmax.f32 %v927, 0.0
      %v1038 = vmax.f32 %v929, 0.0
      %v1039 = vmax.f32 %v931, 0.0
      %v1040 = vmax.f32 %v933, 0.0
      %v1041 = vmax.f32 %v937, 0.0
      %v1042 = vmax.f32 %v939, 0.0
      %v1043 = vmax.f32 %v941, 0.0
      %v1044 = vmax.f32 %v943, 0.0
      %v1045 = vmax.f32 %v947, 0.0
      %v1046 = vmax.f32 %v949, 0.0
      %v1047 = vmax.f32 %v951, 0.0
      %v1048 = vmax.f32 %v953, 0.0
      %v1049 = vmax.f32 %v957, 0.0
      %v1050 = vmax.f32 %v959, 0.0
      %v1051 = vmax.f32 %v961, 0.0
      %v1052 = vmax.f32 %v963, 0.0
      %v1053 = vmax.f32 %v967, 0.0
      %v1054 = vmax.f32 %v969, 0.0
      %v1055 = vmax.f32 %v971, 0.0
      %v1056 = vmax.f32 %v973, 0.0
      %v1057 = vmax.f32 %v977, 0.0
      %v1058 = vmax.f32 %v979, 0.0
      %v1059 = vmax.f32 %v981, 0.0
      %v1060 = vmax.f32 %v983, 0.0
      %v1061 = vmax.f32 %v987, 0.0
      %v1062 = vmax.f32 %v989, 0.0
      %v1063 = vmax.f32 %v991, 0.0
      %v1064 = vmax.f32 %v993, 0.0
      %v1065 = vmax.f32 %v997, 0.0
      %v1066 = vmax.f32 %v999, 0.0
      %v1067 = vmax.f32 %v1001, 0.0
      %v1068 = vmax.f32 %v1003, 0.0
      %v1069 = vpack.c.bf16 %v1007, %v1005
      %v1070 = vpack.c.bf16 %v1008, %v1006
      %v1071 = vpack.c.bf16 %v1011, %v1009
      %v1072 = vpack.c.bf16 %v1012, %v1010
      %v1073 = vpack.c.bf16 %v1015, %v1013
      %v1074 = vpack.c.bf16 %v1016, %v1014
      %v1075 = vpack.c.bf16 %v1019, %v1017
      %v1076 = vpack.c.bf16 %v1020, %v1018
      %v1077 = vpack.c.bf16 %v1023, %v1021
      %v1078 = vpack.c.bf16 %v1024, %v1022
      %v1079 = vpack.c.bf16 %v1027, %v1025
      %v1080 = vpack.c.bf16 %v1028, %v1026
      %v1081 = vpack.c.bf16 %v1031, %v1029
      %v1082 = vpack.c.bf16 %v1032, %v1030
      %v1083 = vpack.c.bf16 %v1035, %v1033
      %v1084 = vpack.c.bf16 %v1036, %v1034
      %v1085 = vpack.c.bf16 %v1039, %v1037
      %v1086 = vpack.c.bf16 %v1040, %v1038
      %v1087 = vpack.c.bf16 %v1043, %v1041
      %v1088 = vpack.c.bf16 %v1044, %v1042
      %v1089 = vpack.c.bf16 %v1047, %v1045
      %v1090 = vpack.c.bf16 %v1048, %v1046
      %v1091 = vpack.c.bf16 %v1051, %v1049
      %v1092 = vpack.c.bf16 %v1052, %v1050
      %v1093 = vpack.c.bf16 %v1055, %v1053
      %v1094 = vpack.c.bf16 %v1056, %v1054
      %v1095 = vpack.c.bf16 %v1059, %v1057
      %v1096 = vpack.c.bf16 %v1060, %v1058
      %v1097 = vpack.c.bf16 %v1063, %v1061
      %v1098 = vpack.c.bf16 %v1064, %v1062
      %v1099 = vpack.c.bf16 %v1067, %v1065
      %v1100 = vpack.c.bf16 %v1068, %v1066
      %v1101 = vld [vmem:[%s6] sm:$0xf]
      %v1102 = vld [vmem:[%s6 + $0x4] sm:$0xf]
      %v1103 = vld [vmem:[%s6 + $0x8] sm:$0xf]
      %v1104 = vld [vmem:[%s6 + $0xc] sm:$0xf]
      %v1105 = vld [vmem:[%s6 + $0x10] sm:$0xf]
      %v1106 = vld [vmem:[%s6 + $0x14] sm:$0xf]
      %v1107 = vld [vmem:[%s6 + $0x18] sm:$0xf]
      %v1108 = vld [vmem:[%s6 + $0x1c] sm:$0xf]
      %v1109 = vld [vmem:[%s6 + $0x20] sm:$0xf]
      %v1110 = vld [vmem:[%s6 + $0x24] sm:$0xf]
      %v1111 = vld [vmem:[%s6 + $0x28] sm:$0xf]
      %v1112 = vld [vmem:[%s6 + $0x2c] sm:$0xf]
      %v1113 = vld [vmem:[%s6 + $0x30] sm:$0xf]
      %v1114 = vld [vmem:[%s6 + $0x34] sm:$0xf]
      %v1115 = vld [vmem:[%s6 + $0x38] sm:$0xf]
      %v1116 = vld [vmem:[%s6 + $0x3c] sm:$0xf]
      %v1117 = vld [vmem:[%s6 + $0x40] sm:$0xf]
      %v1118 = vld [vmem:[%s6 + $0x44] sm:$0xf]
      %v1119 = vld [vmem:[%s6 + $0x48] sm:$0xf]
      %v1120 = vld [vmem:[%s6 + $0x4c] sm:$0xf]
      %v1121 = vld [vmem:[%s6 + $0x50] sm:$0xf]
      %v1122 = vld [vmem:[%s6 + $0x54] sm:$0xf]
      %v1123 = vld [vmem:[%s6 + $0x58] sm:$0xf]
      %v1124 = vld [vmem:[%s6 + $0x5c] sm:$0xf]
      %v1125 = vld [vmem:[%s6 + $0x60] sm:$0xf]
      %v1126 = vld [vmem:[%s6 + $0x64] sm:$0xf]
      %v1127 = vld [vmem:[%s6 + $0x68] sm:$0xf]
      %v1128 = vld [vmem:[%s6 + $0x6c] sm:$0xf]
      %v1129 = vld [vmem:[%s6 + $0x70] sm:$0xf]
      %v1130 = vld [vmem:[%s6 + $0x74] sm:$0xf]
      %v1131 = vld [vmem:[%s6 + $0x78] sm:$0xf]
      %v1132 = vld [vmem:[%s6 + $0x7c] sm:$0xf]
      %v1133 = vld [vmem:[%s7] sm:$0x1]
      %v1135 = vlaneseq
      %v1136 = vshrl.u32 %v1135, 7
      %v1137 = vsub.s32 0, %v1136
      %v1138 = vrot.slane %v1133, %v1137
      %v1172 = vunpack.c.l.b16 %v1101
      %v1173 = vunpack.c.l.b16 %v1102
      %v1174 = vunpack.c.l.b16 %v1103
      %v1175 = vunpack.c.l.b16 %v1104
      %v1176 = vunpack.c.l.b16 %v1105
      %v1177 = vunpack.c.l.b16 %v1106
      %v1178 = vunpack.c.l.b16 %v1107
      %v1179 = vunpack.c.l.b16 %v1108
      %v1180 = vunpack.c.l.b16 %v1109
      %v1181 = vunpack.c.l.b16 %v1110
      %v1182 = vunpack.c.l.b16 %v1111
      %v1183 = vunpack.c.l.b16 %v1112
      %v1184 = vunpack.c.l.b16 %v1113
      %v1185 = vunpack.c.l.b16 %v1114
      %v1186 = vunpack.c.l.b16 %v1115
      %v1187 = vunpack.c.l.b16 %v1116
      %v1188 = vunpack.c.l.b16 %v1117
      %v1189 = vunpack.c.l.b16 %v1118
      %v1190 = vunpack.c.l.b16 %v1119
      %v1191 = vunpack.c.l.b16 %v1120
      %v1192 = vunpack.c.l.b16 %v1121
      %v1193 = vunpack.c.l.b16 %v1122
      %v1194 = vunpack.c.l.b16 %v1123
      %v1195 = vunpack.c.l.b16 %v1124
      %v1196 = vunpack.c.l.b16 %v1125
      %v1197 = vunpack.c.l.b16 %v1126
      %v1198 = vunpack.c.l.b16 %v1127
      %v1199 = vunpack.c.l.b16 %v1128
      %v1200 = vunpack.c.l.b16 %v1129
      %v1201 = vunpack.c.l.b16 %v1130
      %v1202 = vunpack.c.l.b16 %v1131
      %v1203 = vunpack.c.l.b16 %v1132
      %v1204 = vpack.c.b16 %v1173, %v1172
      %v1205 = vpack.c.b16 %v1175, %v1174
      %v1206 = vpack.c.b16 %v1177, %v1176
      %v1207 = vpack.c.b16 %v1179, %v1178
      %v1208 = vpack.c.b16 %v1181, %v1180
      %v1209 = vpack.c.b16 %v1183, %v1182
      %v1210 = vpack.c.b16 %v1185, %v1184
      %v1211 = vpack.c.b16 %v1187, %v1186
      %v1212 = vpack.c.b16 %v1189, %v1188
      %v1213 = vpack.c.b16 %v1191, %v1190
      %v1214 = vpack.c.b16 %v1193, %v1192
      %v1215 = vpack.c.b16 %v1195, %v1194
      %v1216 = vpack.c.b16 %v1197, %v1196
      %v1217 = vpack.c.b16 %v1199, %v1198
      %v1218 = vpack.c.b16 %v1201, %v1200
      %v1219 = vpack.c.b16 %v1203, %v1202
      %1236 = vmatprep.subr.bf16.mxu0 0
      %1237 = vmatpush1.bf16.msra.mxu0 %v1211
      %1238 = vmatprep.subr.bf16.mxu0 0
      %1239 = vmatpush1.bf16.msra.mxu0 %v1210
      %1240 = vmatprep.subr.bf16.mxu0 0
      %1241 = vmatpush1.bf16.msra.mxu0 %v1209
      %1242 = vmatprep.subr.bf16.mxu0 0
      %1243 = vmatpush1.bf16.msra.mxu0 %v1208
      %1244 = vmatprep.subr.bf16.mxu0 0
      %1245 = vmatpush1.bf16.msra.mxu0 %v1207
      %1246 = vmatprep.subr.bf16.mxu0 0
      %1247 = vmatpush1.bf16.msra.mxu0 %v1206
      %1248 = vmatprep.subr.bf16.mxu0 0
      %1249 = vmatpush1.bf16.msra.mxu0 %v1205
      %1250 = vmatprep.subr.bf16.mxu0 0
      %1251 = vmatpush1.bf16.msra.mxu0 %v1204
      %1252 = vmatprep.subr.bf16.mxu0 0
      %1253 = vmatpush2.bf16.msra.mxu0 %v1219
      %1254 = vmatprep.subr.bf16.mxu0 0
      %1255 = vmatpush2.bf16.msra.mxu0 %v1218
      %1256 = vmatprep.subr.bf16.mxu0 0
      %1257 = vmatpush2.bf16.msra.mxu0 %v1217
      %1258 = vmatprep.subr.bf16.mxu0 0
      %1259 = vmatpush2.bf16.msra.mxu0 %v1216
      %1260 = vmatprep.subr.bf16.mxu0 0
      %1261 = vmatpush2.bf16.msra.mxu0 %v1215
      %1262 = vmatprep.subr.bf16.mxu0 0
      %1263 = vmatpush2.bf16.msra.mxu0 %v1214
      %1264 = vmatprep.subr.bf16.mxu0 0
      %1265 = vmatpush2.bf16.msra.mxu0 %v1213
      %1266 = vmatprep.subr.bf16.mxu0 0
      %1267 = vmatpush2.bf16.msra.mxu0 %v1212
      %1268 = vmatprep.mubr.bf16.mxu0 %v1070
      %1269 = vmatmul.mubr.bf16.gmra.mxu0 %v1069
      %v1270 = vpop.f32.mrf.mxu0
      %v1271 = vadd.f32 %v1138, %v1270
      %v1272 = vpop.f32.mrf.mxu0
      %v1273 = vpop.f32.mrf.mxu0
      %v1274 = vadd.f32 %v1138, %v1273
      %v1275 = vpop.f32.mrf.mxu0
      %1276 = vmatprep.mubr.bf16.mxu0 %v1072
      %1277 = vmatmul.mubr.bf16.gmra.mxu0 %v1071
      %v1278 = vpop.f32.mrf.mxu0
      %v1279 = vadd.f32 %v1138, %v1278
      %v1280 = vpop.f32.mrf.mxu0
      %v1281 = vpop.f32.mrf.mxu0
      %v1282 = vadd.f32 %v1138, %v1281
      %v1283 = vpop.f32.mrf.mxu0
      %1284 = vmatprep.mubr.bf16.mxu0 %v1074
      %1285 = vmatmul.mubr.bf16.gmra.mxu0 %v1073
      %v1286 = vpop.f32.mrf.mxu0
      %v1287 = vadd.f32 %v1138, %v1286
      %v1288 = vpop.f32.mrf.mxu0
      %v1289 = vpop.f32.mrf.mxu0
      %v1290 = vadd.f32 %v1138, %v1289
      %v1291 = vpop.f32.mrf.mxu0
      %1292 = vmatprep.mubr.bf16.mxu0 %v1076
      %1293 = vmatmul.mubr.bf16.gmra.mxu0 %v1075
      %v1294 = vpop.f32.mrf.mxu0
      %v1295 = vadd.f32 %v1138, %v1294
      %v1296 = vpop.f32.mrf.mxu0
      %v1297 = vpop.f32.mrf.mxu0
      %v1298 = vadd.f32 %v1138, %v1297
      %v1299 = vpop.f32.mrf.mxu0
      %1300 = vmatprep.mubr.bf16.mxu0 %v1078
      %1301 = vmatmul.mubr.bf16.gmra.mxu0 %v1077
      %v1302 = vpop.f32.mrf.mxu0
      %v1303 = vadd.f32 %v1138, %v1302
      %v1304 = vpop.f32.mrf.mxu0
      %v1305 = vpop.f32.mrf.mxu0
      %v1306 = vadd.f32 %v1138, %v1305
      %v1307 = vpop.f32.mrf.mxu0
      %1308 = vmatprep.mubr.bf16.mxu0 %v1080
      %1309 = vmatmul.mubr.bf16.gmra.mxu0 %v1079
      %v1310 = vpop.f32.mrf.mxu0
      %v1311 = vadd.f32 %v1138, %v1310
      %v1312 = vpop.f32.mrf.mxu0
      %v1313 = vpop.f32.mrf.mxu0
      %v1314 = vadd.f32 %v1138, %v1313
      %v1315 = vpop.f32.mrf.mxu0
      %1316 = vmatprep.mubr.bf16.mxu0 %v1082
      %1317 = vmatmul.mubr.bf16.gmra.mxu0 %v1081
      %v1318 = vpop.f32.mrf.mxu0
      %v1319 = vadd.f32 %v1138, %v1318
      %v1320 = vpop.f32.mrf.mxu0
      %v1321 = vpop.f32.mrf.mxu0
      %v1322 = vadd.f32 %v1138, %v1321
      %v1323 = vpop.f32.mrf.mxu0
      %1324 = vmatprep.mubr.bf16.mxu0 %v1084
      %1325 = vmatmul.mubr.bf16.gmra.mxu0 %v1083
      %v1326 = vpop.f32.mrf.mxu0
      %v1327 = vadd.f32 %v1138, %v1326
      %v1328 = vpop.f32.mrf.mxu0
      %v1329 = vpop.f32.mrf.mxu0
      %v1330 = vadd.f32 %v1138, %v1329
      %v1331 = vpop.f32.mrf.mxu0
      %1332 = vmatprep.mubr.bf16.mxu0 %v1086
      %1333 = vmatmul.mubr.bf16.gmra.mxu0 %v1085
      %v1334 = vpop.f32.mrf.mxu0
      %v1335 = vadd.f32 %v1138, %v1334
      %v1336 = vpop.f32.mrf.mxu0
      %v1337 = vpop.f32.mrf.mxu0
      %v1338 = vadd.f32 %v1138, %v1337
      %v1339 = vpop.f32.mrf.mxu0
      %1340 = vmatprep.mubr.bf16.mxu0 %v1088
      %1341 = vmatmul.mubr.bf16.gmra.mxu0 %v1087
      %v1342 = vpop.f32.mrf.mxu0
      %v1343 = vadd.f32 %v1138, %v1342
      %v1344 = vpop.f32.mrf.mxu0
      %v1345 = vpop.f32.mrf.mxu0
      %v1346 = vadd.f32 %v1138, %v1345
      %v1347 = vpop.f32.mrf.mxu0
      %1348 = vmatprep.mubr.bf16.mxu0 %v1090
      %1349 = vmatmul.mubr.bf16.gmra.mxu0 %v1089
      %v1350 = vpop.f32.mrf.mxu0
      %v1351 = vadd.f32 %v1138, %v1350
      %v1352 = vpop.f32.mrf.mxu0
      %v1353 = vpop.f32.mrf.mxu0
      %v1354 = vadd.f32 %v1138, %v1353
      %v1355 = vpop.f32.mrf.mxu0
      %1356 = vmatprep.mubr.bf16.mxu0 %v1092
      %1357 = vmatmul.mubr.bf16.gmra.mxu0 %v1091
      %v1358 = vpop.f32.mrf.mxu0
      %v1359 = vadd.f32 %v1138, %v1358
      %v1360 = vpop.f32.mrf.mxu0
      %v1361 = vpop.f32.mrf.mxu0
      %v1362 = vadd.f32 %v1138, %v1361
      %v1363 = vpop.f32.mrf.mxu0
      %1364 = vmatprep.mubr.bf16.mxu0 %v1094
      %1365 = vmatmul.mubr.bf16.gmra.mxu0 %v1093
      %v1366 = vpop.f32.mrf.mxu0
      %v1367 = vadd.f32 %v1138, %v1366
      %v1368 = vpop.f32.mrf.mxu0
      %v1369 = vpop.f32.mrf.mxu0
      %v1370 = vadd.f32 %v1138, %v1369
      %v1371 = vpop.f32.mrf.mxu0
      %1372 = vmatprep.mubr.bf16.mxu0 %v1096
      %1373 = vmatmul.mubr.bf16.gmra.mxu0 %v1095
      %v1374 = vpop.f32.mrf.mxu0
      %v1375 = vadd.f32 %v1138, %v1374
      %v1376 = vpop.f32.mrf.mxu0
      %v1377 = vpop.f32.mrf.mxu0
      %v1378 = vadd.f32 %v1138, %v1377
      %v1379 = vpop.f32.mrf.mxu0
      %1380 = vmatprep.mubr.bf16.mxu0 %v1098
      %1381 = vmatmul.mubr.bf16.gmra.mxu0 %v1097
      %v1382 = vpop.f32.mrf.mxu0
      %v1383 = vadd.f32 %v1138, %v1382
      %v1384 = vpop.f32.mrf.mxu0
      %v1385 = vpop.f32.mrf.mxu0
      %v1386 = vadd.f32 %v1138, %v1385
      %v1387 = vpop.f32.mrf.mxu0
      %1388 = vmatprep.mubr.bf16.mxu0 %v1100
      %1389 = vmatmul.mubr.bf16.gmra.mxu0 %v1099
      %v1390 = vpop.f32.mrf.mxu0
      %v1391 = vadd.f32 %v1138, %v1390
      %v1392 = vpop.f32.mrf.mxu0
      %v1393 = vpop.f32.mrf.mxu0
      %v1394 = vadd.f32 %v1138, %v1393
      %v1395 = vpop.f32.mrf.mxu0
      %1396 = vdwg.mxu0
      %v1397 = vmax.f32 %v1271, 0.0
      %v1398 = vmax.f32 %v1274, 0.0
      %v1399 = vmax.f32 %v1279, 0.0
      %v1400 = vmax.f32 %v1282, 0.0
      %v1401 = vmax.f32 %v1287, 0.0
      %v1402 = vmax.f32 %v1290, 0.0
      %v1403 = vmax.f32 %v1295, 0.0
      %v1404 = vmax.f32 %v1298, 0.0
      %v1405 = vmax.f32 %v1303, 0.0
      %v1406 = vmax.f32 %v1306, 0.0
      %v1407 = vmax.f32 %v1311, 0.0
      %v1408 = vmax.f32 %v1314, 0.0
      %v1409 = vmax.f32 %v1319, 0.0
      %v1410 = vmax.f32 %v1322, 0.0
      %v1411 = vmax.f32 %v1327, 0.0
      %v1412 = vmax.f32 %v1330, 0.0
      %v1413 = vmax.f32 %v1335, 0.0
      %v1414 = vmax.f32 %v1338, 0.0
      %v1415 = vmax.f32 %v1343, 0.0
      %v1416 = vmax.f32 %v1346, 0.0
      %v1417 = vmax.f32 %v1351, 0.0
      %v1418 = vmax.f32 %v1354, 0.0
      %v1419 = vmax.f32 %v1359, 0.0
      %v1420 = vmax.f32 %v1362, 0.0
      %v1421 = vmax.f32 %v1367, 0.0
      %v1422 = vmax.f32 %v1370, 0.0
      %v1423 = vmax.f32 %v1375, 0.0
      %v1424 = vmax.f32 %v1378, 0.0
      %v1425 = vmax.f32 %v1383, 0.0
      %v1426 = vmax.f32 %v1386, 0.0
      %v1427 = vmax.f32 %v1391, 0.0
      %v1428 = vmax.f32 %v1394, 0.0
      %v1429 = vpack.c.bf16 %v1398, %v1397
      %v1430 = vpack.c.bf16 %v1400, %v1399
      %v1431 = vpack.c.bf16 %v1402, %v1401
      %v1432 = vpack.c.bf16 %v1404, %v1403
      %v1433 = vpack.c.bf16 %v1406, %v1405
      %v1434 = vpack.c.bf16 %v1408, %v1407
      %v1435 = vpack.c.bf16 %v1410, %v1409
      %v1436 = vpack.c.bf16 %v1412, %v1411
      %v1437 = vpack.c.bf16 %v1414, %v1413
      %v1438 = vpack.c.bf16 %v1416, %v1415
      %v1439 = vpack.c.bf16 %v1418, %v1417
      %v1440 = vpack.c.bf16 %v1420, %v1419
      %v1441 = vpack.c.bf16 %v1422, %v1421
      %v1442 = vpack.c.bf16 %v1424, %v1423
      %v1443 = vpack.c.bf16 %v1426, %v1425
      %v1444 = vpack.c.bf16 %v1428, %v1427
      %v1445 = vld [vmem:[%s8] sm:$0xf]
      %v1446 = vld [vmem:[%s8 + $0x4] sm:$0xf]
      %v1447 = vld [vmem:[%s8 + $0x8] sm:$0xf]
      %v1448 = vld [vmem:[%s8 + $0xc] sm:$0xf]
      %v1449 = vld [vmem:[%s8 + $0x10] sm:$0xf]
      %v1450 = vld [vmem:[%s8 + $0x14] sm:$0xf]
      %v1451 = vld [vmem:[%s8 + $0x18] sm:$0xf]
      %v1452 = vld [vmem:[%s8 + $0x1c] sm:$0xf]
      %v1453 = vld [vmem:[%s8 + $0x20] sm:$0xf]
      %v1454 = vld [vmem:[%s8 + $0x24] sm:$0xf]
      %v1455 = vld [vmem:[%s8 + $0x28] sm:$0xf]
      %v1456 = vld [vmem:[%s8 + $0x2c] sm:$0xf]
      %v1457 = vld [vmem:[%s8 + $0x30] sm:$0xf]
      %v1458 = vld [vmem:[%s8 + $0x34] sm:$0xf]
      %v1459 = vld [vmem:[%s8 + $0x38] sm:$0xf]
      %v1460 = vld [vmem:[%s8 + $0x3c] sm:$0xf]
      %v1461 = vld [vmem:[%s9] sm:$0x1]
      %v1463 = vlaneseq
      %v1464 = vshrl.u32 %v1463, 7
      %v1465 = vsub.s32 0, %v1464
      %v1466 = vrot.slane %v1461, %v1465
      %v1484 = vunpack.c.l.b16 %v1445
      %v1485 = vunpack.c.l.b16 %v1446
      %v1486 = vunpack.c.l.b16 %v1447
      %v1487 = vunpack.c.l.b16 %v1448
      %v1488 = vunpack.c.l.b16 %v1449
      %v1489 = vunpack.c.l.b16 %v1450
      %v1490 = vunpack.c.l.b16 %v1451
      %v1491 = vunpack.c.l.b16 %v1452
      %v1492 = vunpack.c.l.b16 %v1453
      %v1493 = vunpack.c.l.b16 %v1454
      %v1494 = vunpack.c.l.b16 %v1455
      %v1495 = vunpack.c.l.b16 %v1456
      %v1496 = vunpack.c.l.b16 %v1457
      %v1497 = vunpack.c.l.b16 %v1458
      %v1498 = vunpack.c.l.b16 %v1459
      %v1499 = vunpack.c.l.b16 %v1460
      %v1500 = vpack.c.b16 %v1485, %v1484
      %v1501 = vpack.c.b16 %v1487, %v1486
      %v1502 = vpack.c.b16 %v1489, %v1488
      %v1503 = vpack.c.b16 %v1491, %v1490
      %v1504 = vpack.c.b16 %v1493, %v1492
      %v1505 = vpack.c.b16 %v1495, %v1494
      %v1506 = vpack.c.b16 %v1497, %v1496
      %v1507 = vpack.c.b16 %v1499, %v1498
      %1516 = vmatprep.subr.bf16.mxu0 0
      %1517 = vmatpush1.bf16.msra.mxu0 %v1507
      %1518 = vmatprep.subr.bf16.mxu0 0
      %1519 = vmatpush1.bf16.msra.mxu0 %v1506
      %1520 = vmatprep.subr.bf16.mxu0 0
      %1521 = vmatpush1.bf16.msra.mxu0 %v1505
      %1522 = vmatprep.subr.bf16.mxu0 0
      %1523 = vmatpush1.bf16.msra.mxu0 %v1504
      %1524 = vmatprep.subr.bf16.mxu0 0
      %1525 = vmatpush1.bf16.msra.mxu0 %v1503
      %1526 = vmatprep.subr.bf16.mxu0 0
      %1527 = vmatpush1.bf16.msra.mxu0 %v1502
      %1528 = vmatprep.subr.bf16.mxu0 0
      %1529 = vmatpush1.bf16.msra.mxu0 %v1501
      %1530 = vmatprep.subr.bf16.mxu0 0
      %1531 = vmatpush1.bf16.msra.mxu0 %v1500
      %1532 = vmatprep.subr.bf16.mxu0 0
      %1533 = vmatpush2.bf16.msra.mxu0 0
      %1534 = vmatprep.subr.bf16.mxu0 0
      %1535 = vmatpush2.bf16.msra.mxu0 0
      %1536 = vmatprep.subr.bf16.mxu0 0
      %1537 = vmatpush2.bf16.msra.mxu0 0
      %1538 = vmatprep.subr.bf16.mxu0 0
      %1539 = vmatpush2.bf16.msra.mxu0 0
      %1540 = vmatprep.subr.bf16.mxu0 0
      %1541 = vmatpush2.bf16.msra.mxu0 0
      %1542 = vmatprep.subr.bf16.mxu0 0
      %1543 = vmatpush2.bf16.msra.mxu0 0
      %1544 = vmatprep.subr.bf16.mxu0 0
      %1545 = vmatpush2.bf16.msra.mxu0 0
      %1546 = vmatprep.subr.bf16.mxu0 0
      %1547 = vmatpush2.bf16.msra.mxu0 0
      %1548 = vmatprep.mubr.bf16.mxu0 0
      %1549 = vmatmul.mubr.bf16.gmra.mxu0 %v1429
      %v1550 = vpop.f32.mrf.mxu0
      %v1551 = vadd.f32 %v1466, %v1550
      %v1552 = vpop.f32.mrf.mxu0
      %v1553 = vpop.f32.mrf.mxu0
      %v1554 = vadd.f32 %v1466, %v1553
      %v1555 = vpop.f32.mrf.mxu0
      %1556 = vmatprep.mubr.bf16.mxu0 0
      %1557 = vmatmul.mubr.bf16.gmra.mxu0 %v1430
      %v1558 = vpop.f32.mrf.mxu0
      %v1559 = vadd.f32 %v1466, %v1558
      %v1560 = vpop.f32.mrf.mxu0
      %v1561 = vpop.f32.mrf.mxu0
      %v1562 = vadd.f32 %v1466, %v1561
      %v1563 = vpop.f32.mrf.mxu0
      %1564 = vmatprep.mubr.bf16.mxu0 0
      %1565 = vmatmul.mubr.bf16.gmra.mxu0 %v1431
      %v1566 = vpop.f32.mrf.mxu0
      %v1567 = vadd.f32 %v1466, %v1566
      %v1568 = vpop.f32.mrf.mxu0
      %v1569 = vpop.f32.mrf.mxu0
      %v1570 = vadd.f32 %v1466, %v1569
      %v1571 = vpop.f32.mrf.mxu0
      %1572 = vmatprep.mubr.bf16.mxu0 0
      %1573 = vmatmul.mubr.bf16.gmra.mxu0 %v1432
      %v1574 = vpop.f32.mrf.mxu0
      %v1575 = vadd.f32 %v1466, %v1574
      %v1576 = vpop.f32.mrf.mxu0
      %v1577 = vpop.f32.mrf.mxu0
      %v1578 = vadd.f32 %v1466, %v1577
      %v1579 = vpop.f32.mrf.mxu0
      %1580 = vmatprep.mubr.bf16.mxu0 0
      %1581 = vmatmul.mubr.bf16.gmra.mxu0 %v1433
      %v1582 = vpop.f32.mrf.mxu0
      %v1583 = vadd.f32 %v1466, %v1582
      %v1584 = vpop.f32.mrf.mxu0
      %v1585 = vpop.f32.mrf.mxu0
      %v1586 = vadd.f32 %v1466, %v1585
      %v1587 = vpop.f32.mrf.mxu0
      %1588 = vmatprep.mubr.bf16.mxu0 0
      %1589 = vmatmul.mubr.bf16.gmra.mxu0 %v1434
      %v1590 = vpop.f32.mrf.mxu0
      %v1591 = vadd.f32 %v1466, %v1590
      %v1592 = vpop.f32.mrf.mxu0
      %v1593 = vpop.f32.mrf.mxu0
      %v1594 = vadd.f32 %v1466, %v1593
      %v1595 = vpop.f32.mrf.mxu0
      %1596 = vmatprep.mubr.bf16.mxu0 0
      %1597 = vmatmul.mubr.bf16.gmra.mxu0 %v1435
      %v1598 = vpop.f32.mrf.mxu0
      %v1599 = vadd.f32 %v1466, %v1598
      %v1600 = vpop.f32.mrf.mxu0
      %v1601 = vpop.f32.mrf.mxu0
      %v1602 = vadd.f32 %v1466, %v1601
      %v1603 = vpop.f32.mrf.mxu0
      %1604 = vmatprep.mubr.bf16.mxu0 0
      %1605 = vmatmul.mubr.bf16.gmra.mxu0 %v1436
      %v1606 = vpop.f32.mrf.mxu0
      %v1607 = vadd.f32 %v1466, %v1606
      %v1608 = vpop.f32.mrf.mxu0
      %v1609 = vpop.f32.mrf.mxu0
      %v1610 = vadd.f32 %v1466, %v1609
      %v1611 = vpop.f32.mrf.mxu0
      %1612 = vmatprep.mubr.bf16.mxu0 0
      %1613 = vmatmul.mubr.bf16.gmra.mxu0 %v1437
      %v1614 = vpop.f32.mrf.mxu0
      %v1615 = vadd.f32 %v1466, %v1614
      %v1616 = vpop.f32.mrf.mxu0
      %v1617 = vpop.f32.mrf.mxu0
      %v1618 = vadd.f32 %v1466, %v1617
      %v1619 = vpop.f32.mrf.mxu0
      %1620 = vmatprep.mubr.bf16.mxu0 0
      %1621 = vmatmul.mubr.bf16.gmra.mxu0 %v1438
      %v1622 = vpop.f32.mrf.mxu0
      %v1623 = vadd.f32 %v1466, %v1622
      %v1624 = vpop.f32.mrf.mxu0
      %v1625 = vpop.f32.mrf.mxu0
      %v1626 = vadd.f32 %v1466, %v1625
      %v1627 = vpop.f32.mrf.mxu0
      %1628 = vmatprep.mubr.bf16.mxu0 0
      %1629 = vmatmul.mubr.bf16.gmra.mxu0 %v1439
      %v1630 = vpop.f32.mrf.mxu0
      %v1631 = vadd.f32 %v1466, %v1630
      %v1632 = vpop.f32.mrf.mxu0
      %v1633 = vpop.f32.mrf.mxu0
      %v1634 = vadd.f32 %v1466, %v1633
      %v1635 = vpop.f32.mrf.mxu0
      %1636 = vmatprep.mubr.bf16.mxu0 0
      %1637 = vmatmul.mubr.bf16.gmra.mxu0 %v1440
      %v1638 = vpop.f32.mrf.mxu0
      %v1639 = vadd.f32 %v1466, %v1638
      %v1640 = vpop.f32.mrf.mxu0
      %v1641 = vpop.f32.mrf.mxu0
      %v1642 = vadd.f32 %v1466, %v1641
      %v1643 = vpop.f32.mrf.mxu0
      %1644 = vmatprep.mubr.bf16.mxu0 0
      %1645 = vmatmul.mubr.bf16.gmra.mxu0 %v1441
      %v1646 = vpop.f32.mrf.mxu0
      %v1647 = vadd.f32 %v1466, %v1646
      %v1648 = vpop.f32.mrf.mxu0
      %v1649 = vpop.f32.mrf.mxu0
      %v1650 = vadd.f32 %v1466, %v1649
      %v1651 = vpop.f32.mrf.mxu0
      %1652 = vmatprep.mubr.bf16.mxu0 0
      %1653 = vmatmul.mubr.bf16.gmra.mxu0 %v1442
      %v1654 = vpop.f32.mrf.mxu0
      %v1655 = vadd.f32 %v1466, %v1654
      %v1656 = vpop.f32.mrf.mxu0
      %v1657 = vpop.f32.mrf.mxu0
      %v1658 = vadd.f32 %v1466, %v1657
      %v1659 = vpop.f32.mrf.mxu0
      %1660 = vmatprep.mubr.bf16.mxu0 0
      %1661 = vmatmul.mubr.bf16.gmra.mxu0 %v1443
      %v1662 = vpop.f32.mrf.mxu0
      %v1663 = vadd.f32 %v1466, %v1662
      %v1664 = vpop.f32.mrf.mxu0
      %v1665 = vpop.f32.mrf.mxu0
      %v1666 = vadd.f32 %v1466, %v1665
      %v1667 = vpop.f32.mrf.mxu0
      %1668 = vmatprep.mubr.bf16.mxu0 0
      %1669 = vmatmul.mubr.bf16.gmra.mxu0 %v1444
      %v1670 = vpop.f32.mrf.mxu0
      %v1671 = vadd.f32 %v1466, %v1670
      %v1672 = vpop.f32.mrf.mxu0
      %v1673 = vpop.f32.mrf.mxu0
      %v1674 = vadd.f32 %v1466, %v1673
      %v1675 = vpop.f32.mrf.mxu0
      %1676 = vdwg.mxu0
      %v1677 = vld [vmem:[%s377] sm:$0xff]
      %v1678 = vld [vmem:[%s377 + $0x8] sm:$0xff]
      %v1679 = vld [vmem:[%s377 + $0x10] sm:$0xff]
      %v1680 = vld [vmem:[%s377 + $0x18] sm:$0xff]
      %v1681 = vld [vmem:[%s377 + $0x20] sm:$0xff]
      %v1682 = vld [vmem:[%s377 + $0x28] sm:$0xff]
      %v1683 = vld [vmem:[%s377 + $0x30] sm:$0xff]
      %v1684 = vld [vmem:[%s377 + $0x38] sm:$0xff]
      %v1685 = vld [vmem:[%s377 + $0x40] sm:$0xff]
      %v1686 = vld [vmem:[%s377 + $0x48] sm:$0xff]
      %v1687 = vld [vmem:[%s377 + $0x50] sm:$0xff]
      %v1688 = vld [vmem:[%s377 + $0x58] sm:$0xff]
      %v1689 = vld [vmem:[%s377 + $0x60] sm:$0xff]
      %v1690 = vld [vmem:[%s377 + $0x68] sm:$0xff]
      %v1691 = vld [vmem:[%s377 + $0x70] sm:$0xff]
      %v1692 = vld [vmem:[%s377 + $0x78] sm:$0xff]
      %v1693 = vld [vmem:[%s377 + $0x80] sm:$0xff]
      %v1694 = vld [vmem:[%s377 + $0x88] sm:$0xff]
      %v1695 = vld [vmem:[%s377 + $0x90] sm:$0xff]
      %v1696 = vld [vmem:[%s377 + $0x98] sm:$0xff]
      %v1697 = vld [vmem:[%s377 + $0xa0] sm:$0xff]
      %v1698 = vld [vmem:[%s377 + $0xa8] sm:$0xff]
      %v1699 = vld [vmem:[%s377 + $0xb0] sm:$0xff]
      %v1700 = vld [vmem:[%s377 + $0xb8] sm:$0xff]
      %v1701 = vld [vmem:[%s377 + $0xc0] sm:$0xff]
      %v1702 = vld [vmem:[%s377 + $0xc8] sm:$0xff]
      %v1703 = vld [vmem:[%s377 + $0xd0] sm:$0xff]
      %v1704 = vld [vmem:[%s377 + $0xd8] sm:$0xff]
      %v1705 = vld [vmem:[%s377 + $0xe0] sm:$0xff]
      %v1706 = vld [vmem:[%s377 + $0xe8] sm:$0xff]
      %v1707 = vld [vmem:[%s377 + $0xf0] sm:$0xff]
      %v1708 = vld [vmem:[%s377 + $0xf8] sm:$0xff]
      %1710 = vset.pattern.permute.xlu0 0
      %1711 = vperm.xlu0 %1710, %v1677
      %v1712 = vpop.permute.xlu0 %1711
      %1715 = vset.pattern.permute.xlu0 0
      %1716 = vperm.xlu0 %1715, %v1678
      %v1717 = vpop.permute.xlu0 %1716
      %1720 = vset.pattern.permute.xlu0 0
      %1721 = vperm.xlu0 %1720, %v1679
      %v1722 = vpop.permute.xlu0 %1721
      %1725 = vset.pattern.permute.xlu0 0
      %1726 = vperm.xlu0 %1725, %v1680
      %v1727 = vpop.permute.xlu0 %1726
      %1730 = vset.pattern.permute.xlu0 0
      %1731 = vperm.xlu0 %1730, %v1681
      %v1732 = vpop.permute.xlu0 %1731
      %1735 = vset.pattern.permute.xlu0 0
      %1736 = vperm.xlu0 %1735, %v1682
      %v1737 = vpop.permute.xlu0 %1736
      %1740 = vset.pattern.permute.xlu0 0
      %1741 = vperm.xlu0 %1740, %v1683
      %v1742 = vpop.permute.xlu0 %1741
      %1745 = vset.pattern.permute.xlu0 0
      %1746 = vperm.xlu0 %1745, %v1684
      %v1747 = vpop.permute.xlu0 %1746
      %1750 = vset.pattern.permute.xlu0 0
      %1751 = vperm.xlu0 %1750, %v1685
      %v1752 = vpop.permute.xlu0 %1751
      %1755 = vset.pattern.permute.xlu0 0
      %1756 = vperm.xlu0 %1755, %v1686
      %v1757 = vpop.permute.xlu0 %1756
      %1760 = vset.pattern.permute.xlu0 0
      %1761 = vperm.xlu0 %1760, %v1687
      %v1762 = vpop.permute.xlu0 %1761
      %1765 = vset.pattern.permute.xlu0 0
      %1766 = vperm.xlu0 %1765, %v1688
      %v1767 = vpop.permute.xlu0 %1766
      %1770 = vset.pattern.permute.xlu0 0
      %1771 = vperm.xlu0 %1770, %v1689
      %v1772 = vpop.permute.xlu0 %1771
      %1775 = vset.pattern.permute.xlu0 0
      %1776 = vperm.xlu0 %1775, %v1690
      %v1777 = vpop.permute.xlu0 %1776
      %1780 = vset.pattern.permute.xlu0 0
      %1781 = vperm.xlu0 %1780, %v1691
      %v1782 = vpop.permute.xlu0 %1781
      %1785 = vset.pattern.permute.xlu0 0
      %1786 = vperm.xlu0 %1785, %v1692
      %v1787 = vpop.permute.xlu0 %1786
      %1790 = vset.pattern.permute.xlu0 0
      %1791 = vperm.xlu0 %1790, %v1693
      %v1792 = vpop.permute.xlu0 %1791
      %1795 = vset.pattern.permute.xlu0 0
      %1796 = vperm.xlu0 %1795, %v1694
      %v1797 = vpop.permute.xlu0 %1796
      %1800 = vset.pattern.permute.xlu0 0
      %1801 = vperm.xlu0 %1800, %v1695
      %v1802 = vpop.permute.xlu0 %1801
      %1805 = vset.pattern.permute.xlu0 0
      %1806 = vperm.xlu0 %1805, %v1696
      %v1807 = vpop.permute.xlu0 %1806
      %1810 = vset.pattern.permute.xlu0 0
      %1811 = vperm.xlu0 %1810, %v1697
      %v1812 = vpop.permute.xlu0 %1811
      %1815 = vset.pattern.permute.xlu0 0
      %1816 = vperm.xlu0 %1815, %v1698
      %v1817 = vpop.permute.xlu0 %1816
      %1820 = vset.pattern.permute.xlu0 0
      %1821 = vperm.xlu0 %1820, %v1699
      %v1822 = vpop.permute.xlu0 %1821
      %1825 = vset.pattern.permute.xlu0 0
      %1826 = vperm.xlu0 %1825, %v1700
      %v1827 = vpop.permute.xlu0 %1826
      %1830 = vset.pattern.permute.xlu0 0
      %1831 = vperm.xlu0 %1830, %v1701
      %v1832 = vpop.permute.xlu0 %1831
      %1835 = vset.pattern.permute.xlu0 0
      %1836 = vperm.xlu0 %1835, %v1702
      %v1837 = vpop.permute.xlu0 %1836
      %1840 = vset.pattern.permute.xlu0 0
      %1841 = vperm.xlu0 %1840, %v1703
      %v1842 = vpop.permute.xlu0 %1841
      %1845 = vset.pattern.permute.xlu0 0
      %1846 = vperm.xlu0 %1845, %v1704
      %v1847 = vpop.permute.xlu0 %1846
      %1850 = vset.pattern.permute.xlu0 0
      %1851 = vperm.xlu0 %1850, %v1705
      %v1852 = vpop.permute.xlu0 %1851
      %1855 = vset.pattern.permute.xlu0 0
      %1856 = vperm.xlu0 %1855, %v1706
      %v1857 = vpop.permute.xlu0 %1856
      %1860 = vset.pattern.permute.xlu0 0
      %1861 = vperm.xlu0 %1860, %v1707
      %v1862 = vpop.permute.xlu0 %1861
      %1865 = vset.pattern.permute.xlu0 0
      %1866 = vperm.xlu0 %1865, %v1708
      %v1867 = vpop.permute.xlu0 %1866
      %v1869 = vmul.f32 %v1551, %v1712
      %v1870 = vmul.f32 %v1554, %v1717
      %v1871 = vmul.f32 %v1559, %v1722
      %v1872 = vmul.f32 %v1562, %v1727
      %v1873 = vmul.f32 %v1567, %v1732
      %v1874 = vmul.f32 %v1570, %v1737
      %v1875 = vmul.f32 %v1575, %v1742
      %v1876 = vmul.f32 %v1578, %v1747
      %v1877 = vmul.f32 %v1583, %v1752
      %v1878 = vmul.f32 %v1586, %v1757
      %v1879 = vmul.f32 %v1591, %v1762
      %v1880 = vmul.f32 %v1594, %v1767
      %v1881 = vmul.f32 %v1599, %v1772
      %v1882 = vmul.f32 %v1602, %v1777
      %v1883 = vmul.f32 %v1607, %v1782
      %v1884 = vmul.f32 %v1610, %v1787
      %v1885 = vmul.f32 %v1615, %v1792
      %v1886 = vmul.f32 %v1618, %v1797
      %v1887 = vmul.f32 %v1623, %v1802
      %v1888 = vmul.f32 %v1626, %v1807
      %v1889 = vmul.f32 %v1631, %v1812
      %v1890 = vmul.f32 %v1634, %v1817
      %v1891 = vmul.f32 %v1639, %v1822
      %v1892 = vmul.f32 %v1642, %v1827
      %v1893 = vmul.f32 %v1647, %v1832
      %v1894 = vmul.f32 %v1650, %v1837
      %v1895 = vmul.f32 %v1655, %v1842
      %v1896 = vmul.f32 %v1658, %v1847
      %v1897 = vmul.f32 %v1663, %v1852
      %v1898 = vmul.f32 %v1666, %v1857
      %v1899 = vmul.f32 %v1671, %v1862
      %v1900 = vmul.f32 %v1674, %v1867
      %vm1901 = vcmask 130048
      %1902 = vst.msk [vmem:[%s383] sm:$0xff] %vm1901, %v1869
      %1903 = vst.msk [vmem:[%s383 + $0x8] sm:$0xff] %vm1901, %v1870
      %1904 = vst.msk [vmem:[%s383 + $0x10] sm:$0xff] %vm1901, %v1871
      %1905 = vst.msk [vmem:[%s383 + $0x18] sm:$0xff] %vm1901, %v1872
      %1906 = vst.msk [vmem:[%s383 + $0x20] sm:$0xff] %vm1901, %v1873
      %1907 = vst.msk [vmem:[%s383 + $0x28] sm:$0xff] %vm1901, %v1874
      %1908 = vst.msk [vmem:[%s383 + $0x30] sm:$0xff] %vm1901, %v1875
      %1909 = vst.msk [vmem:[%s383 + $0x38] sm:$0xff] %vm1901, %v1876
      %1910 = vst.msk [vmem:[%s383 + $0x40] sm:$0xff] %vm1901, %v1877
      %1911 = vst.msk [vmem:[%s383 + $0x48] sm:$0xff] %vm1901, %v1878
      %1912 = vst.msk [vmem:[%s383 + $0x50] sm:$0xff] %vm1901, %v1879
      %1913 = vst.msk [vmem:[%s383 + $0x58] sm:$0xff] %vm1901, %v1880
      %1914 = vst.msk [vmem:[%s383 + $0x60] sm:$0xff] %vm1901, %v1881
      %1915 = vst.msk [vmem:[%s383 + $0x68] sm:$0xff] %vm1901, %v1882
      %1916 = vst.msk [vmem:[%s383 + $0x70] sm:$0xff] %vm1901, %v1883
      %1917 = vst.msk [vmem:[%s383 + $0x78] sm:$0xff] %vm1901, %v1884
      %1918 = vst.msk [vmem:[%s383 + $0x80] sm:$0xff] %vm1901, %v1885
      %1919 = vst.msk [vmem:[%s383 + $0x88] sm:$0xff] %vm1901, %v1886
      %1920 = vst.msk [vmem:[%s383 + $0x90] sm:$0xff] %vm1901, %v1887
      %1921 = vst.msk [vmem:[%s383 + $0x98] sm:$0xff] %vm1901, %v1888
      %1922 = vst.msk [vmem:[%s383 + $0xa0] sm:$0xff] %vm1901, %v1889
      %1923 = vst.msk [vmem:[%s383 + $0xa8] sm:$0xff] %vm1901, %v1890
      %1924 = vst.msk [vmem:[%s383 + $0xb0] sm:$0xff] %vm1901, %v1891
      %1925 = vst.msk [vmem:[%s383 + $0xb8] sm:$0xff] %vm1901, %v1892
      %1926 = vst.msk [vmem:[%s383 + $0xc0] sm:$0xff] %vm1901, %v1893
      %1927 = vst.msk [vmem:[%s383 + $0xc8] sm:$0xff] %vm1901, %v1894
      %1928 = vst.msk [vmem:[%s383 + $0xd0] sm:$0xff] %vm1901, %v1895
      %1929 = vst.msk [vmem:[%s383 + $0xd8] sm:$0xff] %vm1901, %v1896
      %1930 = vst.msk [vmem:[%s383 + $0xe0] sm:$0xff] %vm1901, %v1897
      %1931 = vst.msk [vmem:[%s383 + $0xe8] sm:$0xff] %vm1901, %v1898
      %1932 = vst.msk [vmem:[%s383 + $0xf0] sm:$0xff] %vm1901, %v1899
      %1933 = vst.msk [vmem:[%s383 + $0xf8] sm:$0xff] %vm1901, %v1900
      %s1934 = smul.u32 32, %s21
      %p1935 = scmp.lt.s32.totalorder %s1934, 255
      %s1936 = scalar_select %p1935, %s1934, 255
      %s1937 = smul.addr %s1936, 8
      %s1938 = scalar_lea.vmem %s10, %s1937
      // Predicated region
      $region61: #{_lambda_.1} parent=59 // pred_check
        %p1939 = pneg %p259
      $region62: #{_lambda_.1} parent=59 // pred_check_branch
        %1941 = sbr.rel (%p1939) target = $region64
      $region63: #{_lambda_.1} parent=59 // pred_region
        %s1942 = smul.u32 32, %s21
      $region64: #{_lambda_.1} parent=59 // pred_fallthru
        _
    $region60: #{_lambda_.1} parent=5 // pred_fallthru
      _
    %p1943 = scmp.le.s32.totalorder 2, %s16
    // Predicated region
    $region65: #{_lambda_.1} parent=5 // pred_check
      %p1944 = pneg %p1943
    $region66: #{_lambda_.1} parent=5 // pred_check_branch
      %1946 = sbr.rel (%p1944) target = $region68
    $region67: #{_lambda_.1} parent=5 // pred_region
      %s1947 = ssub.s32 %s16, 2
      // Predicated region
      $region69: #{_lambda_.1} parent=67 // pred_check
        %p1948 = pneg %p265
      $region70: #{_lambda_.1} parent=67 // pred_check_branch
        %1950 = sbr.rel (%p1948) target = $region72
      $region71: #{_lambda_.1} parent=67 // pred_region
        %s1951 = smul.u32 32, %s22
        %p1952 = scmp.lt.s32.totalorder %s1951, 255
        %s1953 = scalar_select %p1952, %s1951, 255
        %s1954 = smul.addr %s1953, 8
        %s1955 = scalar_lea.vmem %s10, %s1954
      $region72: #{_lambda_.1} parent=67 // pred_fallthru
        _
    $region68: #{_lambda_.1} parent=5 // pred_fallthru
      _
  $region6: #{_lambda_.1} parent=0 // loop_footer
    %s20 = sadd.s32 1, %s16
  $region7: #{_lambda_.1} parent=0 // loop_footer_branch
    %15 = sbr.rel target = $region3
  $region8: #{_lambda_.1} parent=0 // loop_exit
    _

</llo_original>
